<compile_context>
chip_gen: v7x
topology: tpu7x:2x2x1
jax: 0.10.0
libtpu: 0.0.40
codegen_flags: <defaults>
</compile_context>

<pallas_src>
import functools
import math

import jax
import jax.numpy as jnp
from jax import lax
from jax.experimental import pallas as pl
from jax.experimental.pallas import tpu as pltpu


def _self_attention_kernel(x_ref, gavg_ref, gnw_ref, gnb_ref,
                           wq_ref, wk_ref, wv_ref, wo_ref, bo_ref,
                           out_ref, q_scr, o_acc, *, n_head, eps, tq):
    # One batch element per grid step.  Layout: (C, S), S = H*W lane-dense.
    x = x_ref[...].astype(jnp.float32)                           # (C, S)
    C, S = x.shape
    hd = C // n_head
    n_chunks = S // tq

    # ---- GroupNorm (f32 stats, single fused group-averaging matmul) -------
    inv_s = 1.0 / float(S)
    stats = jnp.concatenate(
        [jnp.sum(x, axis=1, keepdims=True),
         jnp.sum(x * x, axis=1, keepdims=True)], axis=1) * inv_s  # (C, 2)
    # gavg is block-diagonal: (gavg @ stat)[c] = mean of stat over c's group.
    gstats = jnp.dot(gavg_ref[...], stats,
                     preferred_element_type=jnp.float32)          # (C, 2)
    g_mean = gstats[:, 0:1]
    g_var = jnp.maximum(gstats[:, 1:2] - g_mean * g_mean, 0.0)    # clamp >= 0
    inv_std = lax.rsqrt(g_var + eps)
    xn = ((x - g_mean) * inv_std * gnw_ref[...] + gnb_ref[...]
          ).astype(jnp.bfloat16)                                  # (C, S) bf16

    # ---- QKV projection: bf16 MXU operands, f32 accumulation --------------
    # wq already carries the 1/sqrt(C) attention scale (folded in the wrapper).
    q_scr[...] = jnp.dot(wq_ref[...], xn,
                         preferred_element_type=jnp.float32).astype(jnp.bfloat16)
    k = jnp.dot(wk_ref[...], xn,
                preferred_element_type=jnp.float32).astype(jnp.bfloat16)
    v = jnp.dot(wv_ref[...], xn,
                preferred_element_type=jnp.float32).astype(jnp.bfloat16)

    # ---- per-head, query-chunked spatial self-attention --------------------
    for h in range(n_head):                      # n_head is small and static
        r0 = h * hd
        kh = k[r0:r0 + hd, :]                                     # (hd, S)
        vh = v[r0:r0 + hd, :]                                     # (hd, S)

        def q_chunk(off, size, _kh=kh, _vh=vh, _r0=r0):
            qc = q_scr[_r0:_r0 + hd, pl.ds(off, size)]            # (hd, tq) bf16
            # logits[s, t] = sum_d q[d, s] * k[d, t]  (contract channel dim,
            # no materialized transpose).
            logits = lax.dot_general(qc, _kh, (((0,), (0,)), ((), ())),
                                     preferred_element_type=jnp.float32)  # (tq,S)
            m = jnp.max(logits, axis=-1, keepdims=True)
            p = jnp.exp(logits - m)                               # f32 (tq, S)
            denom = jnp.sum(p, axis=-1, keepdims=True)            # (tq, 1)
            # Unnormalized P @ V on bf16 operands; defer the softmax divide.
            oh = lax.dot_general(_vh, p.astype(jnp.bfloat16),
                                 (((1,), (1,)), ((), ())),
                                 preferred_element_type=jnp.float32)  # (hd, tq)
            inv = pl.reciprocal(denom, approx=True)               # EUP path
            oh = oh * jnp.transpose(inv)                          # (hd, tq)
            o_acc[_r0:_r0 + hd, pl.ds(off, size)] = oh.astype(jnp.bfloat16)

        if n_chunks == 1:
            q_chunk(0, S)
        else:
            def body(t, carry):
                q_chunk(pl.multiple_of(t * tq, tq), tq)
                return carry
            lax.fori_loop(0, n_chunks, body, 0)

    # ---- output 1x1 conv + bias + residual ---------------------------------
    proj = jnp.dot(wo_ref[...], o_acc[...],
                   preferred_element_type=jnp.float32) + bo_ref[...]
    out_ref[...] = (proj + x).astype(out_ref.dtype)


def self_attention(x, gn_weight, gn_bias, w_qkv, w_out, b_out,
                   *, n_head=1, norm_groups=32, eps=1e-5):
    """x: (B, C, H, W); gn_weight/gn_bias: (C,); w_qkv: (3C, C) (1x1 conv weight,
    no bias); w_out: (C, C); b_out: (C,)."""
    B, C, H, W = x.shape
    S = H * W
    assert C % n_head == 0 and C % norm_groups == 0
    hd = C // n_head
    # TODO(synk): if S is not a multiple of 128 (e.g. the 8x8 UNet level) lanes
    # run partially masked; pad/pack batch elements in the caller for full width.

    # ---- wrapper-side glue (runs once, plain JAX) --------------------------
    # Reorder the fused qkv conv weight: torch chunks (q,k,v) *within* each
    # head's 3*hd output-channel block.  Build head-major (C, C) projections,
    # fold the 1/sqrt(C) scale into Wq, and keep MXU weights in bf16.
    scale = 1.0 / math.sqrt(C)
    w3 = w_qkv.reshape(n_head, 3 * hd, C).astype(jnp.float32)
    wq = (w3[:, 0 * hd:1 * hd, :].reshape(C, C) * scale).astype(jnp.bfloat16)
    wk = w3[:, 1 * hd:2 * hd, :].reshape(C, C).astype(jnp.bfloat16)
    wv = w3[:, 2 * hd:3 * hd, :].reshape(C, C).astype(jnp.bfloat16)
    wo = w_out.reshape(C, C).astype(jnp.bfloat16)
    bo = b_out.reshape(C, 1).astype(jnp.float32)
    gnw = gn_weight.reshape(C, 1).astype(jnp.float32)
    gnb = gn_bias.reshape(C, 1).astype(jnp.float32)

    # Block-diagonal group-averaging matrix for GroupNorm statistics (f32).
    cpg = C // norm_groups
    gid = jnp.arange(C) // cpg
    gavg = (gid[:, None] == gid[None, :]).astype(jnp.float32) / float(cpg)

    x3 = x.reshape(B, C, S)

    # ---- query-chunk size & explicit VMEM budget per TPU generation --------
    try:
        vmem_cap = int(pltpu.get_tpu_info().vmem_capacity_bytes)
    except Exception:
        vmem_cap = 64 * 1024 * 1024          # conservative (v7x-sized) default
    budget = int(0.80 * vmem_cap)

    def vmem_estimate(tq):
        cs = C * S
        est = (4 * cs * 4                    # x / out blocks (double-buffered, f32)
               + cs * 4                      # f32 x kept live for the residual
               + cs * 2                      # xn (bf16)
               + 4 * cs * 2                  # q_scr + o_acc scratch, k + v values
               + tq * S * (4 + 4 + 2)        # logits f32 + p f32 + p bf16
               + 2 * (4 * C * C * 2 + C * C * 4))   # resident weights (+buffer)
        return int(est * 1.25) + (4 << 20)

    tq_candidates = [t for t in (512, 256, 128) if S % t == 0] or [S]
    tq = tq_candidates[-1]
    for t in tq_candidates:
        if vmem_estimate(t) <= budget:
            tq = t
            break
    vmem_limit = int(min(max(vmem_estimate(tq), 16 << 20), budget))

    kernel = functools.partial(_self_attention_kernel,
                               n_head=n_head, eps=eps, tq=tq)

    def _full_spec(shape):
        # Whole-array block, constant index -> stays VMEM-resident across grid.
        return pl.BlockSpec(shape, lambda b: (0,) * len(shape))

    out3 = pl.pallas_call(
        kernel,
        out_shape=jax.ShapeDtypeStruct((B, C, S), x.dtype),
        grid=(B,),
        in_specs=[
            pl.BlockSpec((None, C, S), lambda b: (b, 0, 0)),   # x (per-batch)
            _full_spec((C, C)),                                # group-avg matrix
            _full_spec((C, 1)),                                # GroupNorm weight
            _full_spec((C, 1)),                                # GroupNorm bias
            _full_spec((C, C)),                                # Wq (scaled, bf16)
            _full_spec((C, C)),                                # Wk (bf16)
            _full_spec((C, C)),                                # Wv (bf16)
            _full_spec((C, C)),                                # Wout (bf16)
            _full_spec((C, 1)),                                # bout
        ],
        out_specs=pl.BlockSpec((None, C, S), lambda b: (b, 0, 0)),
        scratch_shapes=[pltpu.VMEM((C, S), jnp.bfloat16),      # q (scaled)
                        pltpu.VMEM((C, S), jnp.bfloat16)],     # per-head outputs
        compiler_params=pltpu.CompilerParams(
            dimension_semantics=("parallel",),
            vmem_limit_bytes=vmem_limit),
    )(x3, gavg, gnw, gnb, wq, wk, wv, wo, bo)

    return out3.reshape(B, C, H, W)


def _reference(x, gn_w, gn_b, w_qkv, w_out, b_out, *, n_head, norm_groups, eps=1e-5):
    """Pure-JAX transliteration of the PyTorch module."""
    B, C, H, W = x.shape
    hd = C // n_head
    pe = lax.Precision.HIGHEST

    xg = x.reshape(B, norm_groups, C // norm_groups, H, W)
    mean = xg.mean(axis=(2, 3, 4), keepdims=True)
    var = xg.var(axis=(2, 3, 4), keepdims=True)
    xn = (xg - mean) / jnp.sqrt(var + eps)
    xn = xn.reshape(B, C, H, W) * gn_w.reshape(1, C, 1, 1) + gn_b.reshape(1, C, 1, 1)

    qkv = jnp.einsum('oc,bchw->bohw', w_qkv, xn, precision=pe)
    qkv = qkv.reshape(B, n_head, hd * 3, H, W)
    q, k, v = qkv[:, :, :hd], qkv[:, :, hd:2 * hd], qkv[:, :, 2 * hd:]
    attn = jnp.einsum('bnchw,bncyx->bnhwyx', q, k, precision=pe) / math.sqrt(C)
    attn = attn.reshape(B, n_head, H, W, H * W)
    attn = jax.nn.softmax(attn, axis=-1)
    attn = attn.reshape(B, n_head, H, W, H, W)
    out = jnp.einsum('bnhwyx,bncyx->bnchw', attn, v, precision=pe)
    out = out.reshape(B, C, H, W)
    out = jnp.einsum('oc,bchw->bohw', w_out, out, precision=pe) + b_out.reshape(1, C, 1, 1)
    return out + x


def _run_case(key, B, C, H, W, n_head, norm_groups):
    k_x, k_gw, k_gb, k_qkv, k_wo, k_bo = jax.random.split(key, 6)
    x = jax.random.normal(k_x, (B, C, H, W), dtype=jnp.float32)
    gn_w = 1.0 + 0.1 * jax.random.normal(k_gw, (C,), dtype=jnp.float32)
    gn_b = 0.1 * jax.random.normal(k_gb, (C,), dtype=jnp.float32)
    bound = 1.0 / math.sqrt(C)
    w_qkv = jax.random.uniform(k_qkv, (3 * C, C), jnp.float32, -bound, bound)
    w_out = jax.random.uniform(k_wo, (C, C), jnp.float32, -bound, bound)
    b_out = jax.random.uniform(k_bo, (C,), jnp.float32, -bound, bound)

    out = self_attention(x, gn_w, gn_b, w_qkv, w_out, b_out,
                         n_head=n_head, norm_groups=norm_groups)
    out = jax.block_until_ready(out)

    ref = _reference(x, gn_w, gn_b, w_qkv, w_out, b_out,
                     n_head=n_head, norm_groups=norm_groups)
    assert out.shape == (B, C, H, W)
    err = float(jnp.max(jnp.abs(out - ref)))
    # bf16 MXU operands (f32 accumulation) vs a pure-f32 reference.
    assert jnp.allclose(out, ref, atol=1e-2, rtol=1e-2), err
    return err


if __name__ == "__main__":
    key = jax.random.PRNGKey(0)
    k1, k2 = jax.random.split(key, 2)

    # Case 1: single query chunk (S == TQ), exercises the static path.
    _run_case(k1, B=2, C=32, H=16, W=16, n_head=2, norm_groups=8)
    # Case 2: S = 1024 -> TQ = 512, exercises the chunked fori_loop path.
    _run_case(k2, B=1, C=64, H=32, W=32, n_head=4, norm_groups=16)

    print("KERNEL_OK")
</pallas_src>

<mosaic_0001>
module attributes {stable_mosaic.version = 11 : i64} {
  func.func @_self_attention_kernel(%arg0: i32, %arg1: memref<1x32x256xf32, #tpu.memory_space<vmem>>, %arg2: memref<32x32xf32, #tpu.memory_space<vmem>>, %arg3: memref<32x1xf32, #tpu.memory_space<vmem>>, %arg4: memref<32x1xf32, #tpu.memory_space<vmem>>, %arg5: memref<32x32xbf16, #tpu.memory_space<vmem>>, %arg6: memref<32x32xbf16, #tpu.memory_space<vmem>>, %arg7: memref<32x32xbf16, #tpu.memory_space<vmem>>, %arg8: memref<32x32xbf16, #tpu.memory_space<vmem>>, %arg9: memref<32x1xf32, #tpu.memory_space<vmem>>, %arg10: memref<1x32x256xf32, #tpu.memory_space<vmem>>, %arg11: memref<32x256xbf16, #tpu.memory_space<vmem>>, %arg12: memref<32x256xbf16, #tpu.memory_space<vmem>>) attributes {dimension_semantics = [#tpu.dimension_semantics<parallel>], iteration_bounds = array<i64: 2>, scalar_prefetch = 0 : i64, scratch_operands = 2 : i64, tpu.core_type = #tpu.core_type<tc>, window_params = [{transform_indices = @transform_0, window_bounds = array<i64: 1, 32, 256>}, {pipeline_mode = #tpu.pipeline_mode<synchronous>, transform_indices = @transform_1, window_bounds = array<i64: 32, 32>}, {pipeline_mode = #tpu.pipeline_mode<synchronous>, transform_indices = @transform_2, window_bounds = array<i64: 32, 1>}, {pipeline_mode = #tpu.pipeline_mode<synchronous>, transform_indices = @transform_3, window_bounds = array<i64: 32, 1>}, {pipeline_mode = #tpu.pipeline_mode<synchronous>, transform_indices = @transform_4, window_bounds = array<i64: 32, 32>}, {pipeline_mode = #tpu.pipeline_mode<synchronous>, transform_indices = @transform_5, window_bounds = array<i64: 32, 32>}, {pipeline_mode = #tpu.pipeline_mode<synchronous>, transform_indices = @transform_6, window_bounds = array<i64: 32, 32>}, {pipeline_mode = #tpu.pipeline_mode<synchronous>, transform_indices = @transform_7, window_bounds = array<i64: 32, 32>}, {pipeline_mode = #tpu.pipeline_mode<synchronous>, transform_indices = @transform_8, window_bounds = array<i64: 32, 1>}, {transform_indices = @transform_9, window_bounds = array<i64: 1, 32, 256>}]} {
    %c0 = arith.constant 0 : index
    %c0_0 = arith.constant 0 : index
    %c0_1 = arith.constant 0 : index
    %0 = vector.load %arg1[%c0, %c0_0, %c0_1] : memref<1x32x256xf32, #tpu.memory_space<vmem>>, vector<1x32x256xf32>
    %1 = vector.shape_cast %0 : vector<1x32x256xf32> to vector<32x256xf32>
    %cst = arith.constant dense<0.000000e+00> : vector<32xf32>
    %2 = vector.multi_reduction <add>, %1, %cst [1] : vector<32x256xf32> to vector<32xf32>
    %3 = vector.shape_cast %2 : vector<32xf32> to vector<32x1xf32>
    %4 = arith.mulf %1, %1 : vector<32x256xf32>
    %cst_2 = arith.constant dense<0.000000e+00> : vector<32xf32>
    %5 = vector.multi_reduction <add>, %4, %cst_2 [1] : vector<32x256xf32> to vector<32xf32>
    %6 = vector.shape_cast %5 : vector<32xf32> to vector<32x1xf32>
    %7 = tpu.concatenate %3, %6 in 1 : vector<32x1xf32>, vector<32x1xf32> -> vector<32x2xf32>
    %cst_3 = arith.constant 3.906250e-03 : f32
    %8 = vector.broadcast %cst_3 : f32 to vector<32x2xf32>
    %9 = arith.mulf %7, %8 : vector<32x2xf32>
    %c0_4 = arith.constant 0 : index
    %c0_5 = arith.constant 0 : index
    %10 = vector.load %arg2[%c0_4, %c0_5] : memref<32x32xf32, #tpu.memory_space<vmem>>, vector<32x32xf32>
    %cst_6 = arith.constant dense<0.000000e+00> : vector<32x2xf32>
    %11 = tpu.matmul %10, %9, %cst_6 {dimension_numbers = #tpu.dot_dimension_numbers<[1], [0], [0], [1], [0, 0, 1, 1], [], []>} : vector<32x32xf32>, vector<32x2xf32>, vector<32x2xf32> -> vector<32x2xf32>
    %12 = vector.extract_strided_slice %11 {offsets = [0, 0], sizes = [32, 1], strides = [1, 1]} : vector<32x2xf32> to vector<32x1xf32>
    %13 = vector.extract_strided_slice %11 {offsets = [0, 1], sizes = [32, 1], strides = [1, 1]} : vector<32x2xf32> to vector<32x1xf32>
    %14 = arith.mulf %12, %12 : vector<32x1xf32>
    %15 = arith.subf %13, %14 : vector<32x1xf32>
    %cst_7 = arith.constant 0.000000e+00 : f32
    %16 = vector.broadcast %cst_7 : f32 to vector<32x1xf32>
    %17 = arith.maximumf %15, %16 : vector<32x1xf32>
    %cst_8 = arith.constant 9.99999974E-6 : f32
    %18 = vector.broadcast %cst_8 : f32 to vector<32x1xf32>
    %19 = arith.addf %17, %18 : vector<32x1xf32>
    %20 = math.rsqrt %19 : vector<32x1xf32>
    %21 = vector.broadcast %12 : vector<32x1xf32> to vector<32x256xf32>
    %22 = arith.subf %1, %21 : vector<32x256xf32>
    %23 = vector.broadcast %20 : vector<32x1xf32> to vector<32x256xf32>
    %24 = arith.mulf %22, %23 : vector<32x256xf32>
    %c0_9 = arith.constant 0 : index
    %c0_10 = arith.constant 0 : index
    %25 = vector.load %arg3[%c0_9, %c0_10] : memref<32x1xf32, #tpu.memory_space<vmem>>, vector<32x1xf32>
    %26 = vector.broadcast %25 : vector<32x1xf32> to vector<32x256xf32>
    %27 = arith.mulf %24, %26 : vector<32x256xf32>
    %c0_11 = arith.constant 0 : index
    %c0_12 = arith.constant 0 : index
    %28 = vector.load %arg4[%c0_11, %c0_12] : memref<32x1xf32, #tpu.memory_space<vmem>>, vector<32x1xf32>
    %29 = vector.broadcast %28 : vector<32x1xf32> to vector<32x256xf32>
    %30 = arith.addf %27, %29 : vector<32x256xf32>
    %31 = arith.truncf %30 : vector<32x256xf32> to vector<32x256xbf16>
    %c0_13 = arith.constant 0 : index
    %c0_14 = arith.constant 0 : index
    %32 = vector.load %arg5[%c0_13, %c0_14] : memref<32x32xbf16, #tpu.memory_space<vmem>>, vector<32x32xbf16>
    %cst_15 = arith.constant dense<0.000000e+00> : vector<32x256xf32>
    %33 = tpu.matmul %32, %31, %cst_15 {dimension_numbers = #tpu.dot_dimension_numbers<[1], [0], [0], [1], [0, 0, 1, 1], [], []>} : vector<32x32xbf16>, vector<32x256xbf16>, vector<32x256xf32> -> vector<32x256xf32>
    %34 = arith.truncf %33 : vector<32x256xf32> to vector<32x256xbf16>
    %c0_16 = arith.constant 0 : index
    %c0_17 = arith.constant 0 : index
    %35 = vector.load %arg11[%c0_16, %c0_17] : memref<32x256xbf16, #tpu.memory_space<vmem>>, vector<32x256xbf16>
    tpu.vector_store %arg11[%c0_16, %c0_17], %34 {strides = array<i32>} : memref<32x256xbf16, #tpu.memory_space<vmem>>, vector<32x256xbf16>,
    %c0_18 = arith.constant 0 : index
    %c0_19 = arith.constant 0 : index
    %36 = vector.load %arg6[%c0_18, %c0_19] : memref<32x32xbf16, #tpu.memory_space<vmem>>, vector<32x32xbf16>
    %cst_20 = arith.constant dense<0.000000e+00> : vector<32x256xf32>
    %37 = tpu.matmul %36, %31, %cst_20 {dimension_numbers = #tpu.dot_dimension_numbers<[1], [0], [0], [1], [0, 0, 1, 1], [], []>} : vector<32x32xbf16>, vector<32x256xbf16>, vector<32x256xf32> -> vector<32x256xf32>
    %38 = arith.truncf %37 : vector<32x256xf32> to vector<32x256xbf16>
    %c0_21 = arith.constant 0 : index
    %c0_22 = arith.constant 0 : index
    %39 = vector.load %arg7[%c0_21, %c0_22] : memref<32x32xbf16, #tpu.memory_space<vmem>>, vector<32x32xbf16>
    %cst_23 = arith.constant dense<0.000000e+00> : vector<32x256xf32>
    %40 = tpu.matmul %39, %31, %cst_23 {dimension_numbers = #tpu.dot_dimension_numbers<[1], [0], [0], [1], [0, 0, 1, 1], [], []>} : vector<32x32xbf16>, vector<32x256xbf16>, vector<32x256xf32> -> vector<32x256xf32>
    %41 = arith.truncf %40 : vector<32x256xf32> to vector<32x256xbf16>
    %42 = vector.extract_strided_slice %38 {offsets = [0, 0], sizes = [16, 256], strides = [1, 1]} : vector<32x256xbf16> to vector<16x256xbf16>
    %43 = vector.extract_strided_slice %41 {offsets = [0, 0], sizes = [16, 256], strides = [1, 1]} : vector<32x256xbf16> to vector<16x256xbf16>
    %c0_24 = arith.constant 0 : index
    %c0_25 = arith.constant 0 : index
    %44 = vector.load %arg11[%c0_24, %c0_25] : memref<32x256xbf16, #tpu.memory_space<vmem>>, vector<16x256xbf16>
    %cst_26 = arith.constant dense<0.000000e+00> : vector<256x256xf32>
    %45 = tpu.matmul %44, %42, %cst_26 {dimension_numbers = #tpu.dot_dimension_numbers<[0], [0], [1], [1], [0, 1, 1, 1], [], []>} : vector<16x256xbf16>, vector<16x256xbf16>, vector<256x256xf32> -> vector<256x256xf32>
    %cst_27 = arith.constant dense<0xFF800000> : vector<256xf32>
    %46 = vector.multi_reduction <maximumf>, %45, %cst_27 [1] : vector<256x256xf32> to vector<256xf32>
    %47 = vector.shape_cast %46 : vector<256xf32> to vector<256x1xf32>
    %48 = vector.broadcast %47 : vector<256x1xf32> to vector<256x256xf32>
    %49 = arith.subf %45, %48 : vector<256x256xf32>
    %50 = math.exp %49 : vector<256x256xf32>
    %cst_28 = arith.constant dense<0.000000e+00> : vector<256xf32>
    %51 = vector.multi_reduction <add>, %50, %cst_28 [1] : vector<256x256xf32> to vector<256xf32>
    %52 = vector.shape_cast %51 : vector<256xf32> to vector<256x1xf32>
    %53 = arith.truncf %50 : vector<256x256xf32> to vector<256x256xbf16>
    %cst_29 = arith.constant dense<0.000000e+00> : vector<16x256xf32>
    %54 = tpu.matmul %43, %53, %cst_29 {dimension_numbers = #tpu.dot_dimension_numbers<[1], [1], [0], [0], [0, 0, 1, 0], [], []>} : vector<16x256xbf16>, vector<256x256xbf16>, vector<16x256xf32> -> vector<16x256xf32>
    %55 = tpu.reciprocal %52 {approx = true} : vector<256x1xf32> -> vector<256x1xf32>
    %56 = tpu.transpose %55, [1, 0] : vector<256x1xf32> -> vector<1x256xf32>
    %57 = vector.broadcast %56 : vector<1x256xf32> to vector<16x256xf32>
    %58 = arith.mulf %54, %57 : vector<16x256xf32>
    %59 = arith.truncf %58 : vector<16x256xf32> to vector<16x256xbf16>
    %c0_30 = arith.constant 0 : index
    %c0_31 = arith.constant 0 : index
    %60 = vector.load %arg12[%c0_30, %c0_31] : memref<32x256xbf16, #tpu.memory_space<vmem>>, vector<16x256xbf16>
    tpu.vector_store %arg12[%c0_30, %c0_31], %59 {strides = array<i32>} : memref<32x256xbf16, #tpu.memory_space<vmem>>, vector<16x256xbf16>,
    %61 = vector.extract_strided_slice %38 {offsets = [16, 0], sizes = [16, 256], strides = [1, 1]} : vector<32x256xbf16> to vector<16x256xbf16>
    %62 = vector.extract_strided_slice %41 {offsets = [16, 0], sizes = [16, 256], strides = [1, 1]} : vector<32x256xbf16> to vector<16x256xbf16>
    %c16 = arith.constant 16 : index
    %c0_32 = arith.constant 0 : index
    %63 = vector.load %arg11[%c16, %c0_32] : memref<32x256xbf16, #tpu.memory_space<vmem>>, vector<16x256xbf16>
    %cst_33 = arith.constant dense<0.000000e+00> : vector<256x256xf32>
    %64 = tpu.matmul %63, %61, %cst_33 {dimension_numbers = #tpu.dot_dimension_numbers<[0], [0], [1], [1], [0, 1, 1, 1], [], []>} : vector<16x256xbf16>, vector<16x256xbf16>, vector<256x256xf32> -> vector<256x256xf32>
    %cst_34 = arith.constant dense<0xFF800000> : vector<256xf32>
    %65 = vector.multi_reduction <maximumf>, %64, %cst_34 [1] : vector<256x256xf32> to vector<256xf32>
    %66 = vector.shape_cast %65 : vector<256xf32> to vector<256x1xf32>
    %67 = vector.broadcast %66 : vector<256x1xf32> to vector<256x256xf32>
    %68 = arith.subf %64, %67 : vector<256x256xf32>
    %69 = math.exp %68 : vector<256x256xf32>
    %cst_35 = arith.constant dense<0.000000e+00> : vector<256xf32>
    %70 = vector.multi_reduction <add>, %69, %cst_35 [1] : vector<256x256xf32> to vector<256xf32>
    %71 = vector.shape_cast %70 : vector<256xf32> to vector<256x1xf32>
    %72 = arith.truncf %69 : vector<256x256xf32> to vector<256x256xbf16>
    %cst_36 = arith.constant dense<0.000000e+00> : vector<16x256xf32>
    %73 = tpu.matmul %62, %72, %cst_36 {dimension_numbers = #tpu.dot_dimension_numbers<[1], [1], [0], [0], [0, 0, 1, 0], [], []>} : vector<16x256xbf16>, vector<256x256xbf16>, vector<16x256xf32> -> vector<16x256xf32>
    %74 = tpu.reciprocal %71 {approx = true} : vector<256x1xf32> -> vector<256x1xf32>
    %75 = tpu.transpose %74, [1, 0] : vector<256x1xf32> -> vector<1x256xf32>
    %76 = vector.broadcast %75 : vector<1x256xf32> to vector<16x256xf32>
    %77 = arith.mulf %73, %76 : vector<16x256xf32>
    %78 = arith.truncf %77 : vector<16x256xf32> to vector<16x256xbf16>
    %c16_37 = arith.constant 16 : index
    %c0_38 = arith.constant 0 : index
    %79 = vector.load %arg12[%c16_37, %c0_38] : memref<32x256xbf16, #tpu.memory_space<vmem>>, vector<16x256xbf16>
    tpu.vector_store %arg12[%c16_37, %c0_38], %78 {strides = array<i32>} : memref<32x256xbf16, #tpu.memory_space<vmem>>, vector<16x256xbf16>,
    %c0_39 = arith.constant 0 : index
    %c0_40 = arith.constant 0 : index
    %80 = vector.load %arg8[%c0_39, %c0_40] : memref<32x32xbf16, #tpu.memory_space<vmem>>, vector<32x32xbf16>
    %c0_41 = arith.constant 0 : index
    %c0_42 = arith.constant 0 : index
    %81 = vector.load %arg12[%c0_41, %c0_42] : memref<32x256xbf16, #tpu.memory_space<vmem>>, vector<32x256xbf16>
    %cst_43 = arith.constant dense<0.000000e+00> : vector<32x256xf32>
    %82 = tpu.matmul %80, %81, %cst_43 {dimension_numbers = #tpu.dot_dimension_numbers<[1], [0], [0], [1], [0, 0, 1, 1], [], []>} : vector<32x32xbf16>, vector<32x256xbf16>, vector<32x256xf32> -> vector<32x256xf32>
    %c0_44 = arith.constant 0 : index
    %c0_45 = arith.constant 0 : index
    %83 = vector.load %arg9[%c0_44, %c0_45] : memref<32x1xf32, #tpu.memory_space<vmem>>, vector<32x1xf32>
    %84 = vector.broadcast %83 : vector<32x1xf32> to vector<32x256xf32>
    %85 = arith.addf %82, %84 : vector<32x256xf32>
    %86 = arith.addf %85, %1 : vector<32x256xf32>
    %c0_46 = arith.constant 0 : index
    %c0_47 = arith.constant 0 : index
    %c0_48 = arith.constant 0 : index
    %87 = vector.load %arg10[%c0_46, %c0_47, %c0_48] : memref<1x32x256xf32, #tpu.memory_space<vmem>>, vector<1x32x256xf32>
    %88 = vector.shape_cast %87 : vector<1x32x256xf32> to vector<32x256xf32>
    %89 = vector.shape_cast %86 : vector<32x256xf32> to vector<1x32x256xf32>
    tpu.vector_store %arg10[%c0_46, %c0_47, %c0_48], %89 {strides = array<i32>} : memref<1x32x256xf32, #tpu.memory_space<vmem>>, vector<1x32x256xf32>,
    return
  }
  func.func @transform_0(%arg0: i32) -> (i32, i32, i32) {
    %c0_i32 = arith.constant 0 : i32
    %c0_i32_0 = arith.constant 0 : i32
    %c0_i32_1 = arith.constant 0 : i32
    return %arg0, %c0_i32, %c0_i32_0 : i32, i32, i32
  }
  func.func @transform_1(%arg0: i32) -> (i32, i32) {
    %c0_i32 = arith.constant 0 : i32
    %c0_i32_0 = arith.constant 0 : i32
    %c0_i32_1 = arith.constant 0 : i32
    return %c0_i32, %c0_i32_0 : i32, i32
  }
  func.func @transform_2(%arg0: i32) -> (i32, i32) {
    %c0_i32 = arith.constant 0 : i32
    %c0_i32_0 = arith.constant 0 : i32
    %c0_i32_1 = arith.constant 0 : i32
    return %c0_i32, %c0_i32_0 : i32, i32
  }
  func.func @transform_3(%arg0: i32) -> (i32, i32) {
    %c0_i32 = arith.constant 0 : i32
    %c0_i32_0 = arith.constant 0 : i32
    %c0_i32_1 = arith.constant 0 : i32
    return %c0_i32, %c0_i32_0 : i32, i32
  }
  func.func @transform_4(%arg0: i32) -> (i32, i32) {
    %c0_i32 = arith.constant 0 : i32
    %c0_i32_0 = arith.constant 0 : i32
    %c0_i32_1 = arith.constant 0 : i32
    return %c0_i32, %c0_i32_0 : i32, i32
  }
  func.func @transform_5(%arg0: i32) -> (i32, i32) {
    %c0_i32 = arith.constant 0 : i32
    %c0_i32_0 = arith.constant 0 : i32
    %c0_i32_1 = arith.constant 0 : i32
    return %c0_i32, %c0_i32_0 : i32, i32
  }
  func.func @transform_6(%arg0: i32) -> (i32, i32) {
    %c0_i32 = arith.constant 0 : i32
    %c0_i32_0 = arith.constant 0 : i32
    %c0_i32_1 = arith.constant 0 : i32
    return %c0_i32, %c0_i32_0 : i32, i32
  }
  func.func @transform_7(%arg0: i32) -> (i32, i32) {
    %c0_i32 = arith.constant 0 : i32
    %c0_i32_0 = arith.constant 0 : i32
    %c0_i32_1 = arith.constant 0 : i32
    return %c0_i32, %c0_i32_0 : i32, i32
  }
  func.func @transform_8(%arg0: i32) -> (i32, i32) {
    %c0_i32 = arith.constant 0 : i32
    %c0_i32_0 = arith.constant 0 : i32
    %c0_i32_1 = arith.constant 0 : i32
    return %c0_i32, %c0_i32_0 : i32, i32
  }
  func.func @transform_9(%arg0: i32) -> (i32, i32, i32) {
    %c0_i32 = arith.constant 0 : i32
    %c0_i32_0 = arith.constant 0 : i32
    %c0_i32_1 = arith.constant 0 : i32
    return %arg0, %c0_i32, %c0_i32_0 : i32, i32, i32
  }
}

</mosaic_0001>

<llo_original>
// kernel: tpu_custom_call.1
$region0: #{tpu_custom_call.1}
  #allocation0 [shape = 'u32[]', space=smem, size = 0x4, offset = 0x4, fixed_abs, tag = 'smem constant byte address 0x4 - core index']
  #allocation1 [shape = 'u32[144,128]{1,0:T(1,128)}', space=vmem, size = 0x12000, scoped, tag = 'internal scratch']
  #allocation2 [shape = 'bf16[32,256]{1,0:T(16,128)(2,1)}', space=vmem, size = 0x4000, scoped, tag = 'scratch operand']
  #allocation3 [shape = 'bf16[32,256]{1,0:T(16,128)(2,1)}', space=vmem, size = 0x4000, scoped, tag = 'scratch operand']
  %s0 = inlined_call_operand.hbm [shape: f32[2,32,256], index: 0, kind: input, shape index: {}]
  %s1 = inlined_call_operand.vmem [shape: f32[32,32], index: 1, kind: input, shape index: {}]
  %s2 = inlined_call_operand.vmem [shape: f32[32,1], index: 2, kind: input, shape index: {}]
  %s3 = inlined_call_operand.vmem [shape: f32[32,1], index: 3, kind: input, shape index: {}]
  %s4 = inlined_call_operand.vmem [shape: bf16[32,32], index: 4, kind: input, shape index: {}]
  %s5 = inlined_call_operand.vmem [shape: bf16[32,32], index: 5, kind: input, shape index: {}]
  %s6 = inlined_call_operand.vmem [shape: bf16[32,32], index: 6, kind: input, shape index: {}]
  %s7 = inlined_call_operand.vmem [shape: bf16[32,32], index: 7, kind: input, shape index: {}]
  %s8 = inlined_call_operand.vmem [shape: f32[32,1], index: 8, kind: input, shape index: {}]
  %s9 = inlined_call_operand.hbm [shape: f32[2,32,256], index: 9, kind: output, shape index: {}]
  %s10 = sld [smem:[#allocation0]]
  $region73: #{tpu_custom_call.1} parent=0
    _
  %s12 = ssub.s32 1, %s10
  %s13 = scalar_select 0, %s12, %s10
  $region1: #{tpu_custom_call.1} parent=0
    #allocation4 [shape = 'u8[65536]{0}', space=vmem, size = 0x10000, scoped, tag = 'input window, operand 0']
    #allocation5 [shape = 's32[2]{0}', space=sflag, size = 0x8, scoped, tag = 'scoped memory for tpu_custom_call.1']
    #allocation6 [shape = 's32[2]{0}', space=sflag, size = 0x8, scoped, tag = 'scoped memory for tpu_custom_call.1']
    #allocation7 [shape = 'u8[65536]{0}', space=vmem, size = 0x10000, scoped, tag = 'output window, operand 0']
    %14 = vsyncpa [#allocation5], 0
    %s15 = scalar_lea.sflag [#allocation5], 1
    %16 = vsyncpa %s15, 0
    %17 = vsyncpa [#allocation6], 0
    %s18 = scalar_lea.sflag [#allocation6], 1
    %19 = vsyncpa %s18, 0
    loop: start=0, step=1, limit=4
    $region2: #{tpu_custom_call.1} parent=1 // loop_pre_header
      _
    $region3: #{tpu_custom_call.1} parent=1 // loop_header
      %s21 = sphi 0, %s25
      %p22 = scmp.ge.s32.totalorder %s21, 4
      %s31 = sphi 0, %s33
      %s34 = sphi 0, %s31
      %s35 = sphi 0, %s34
      %s51 = sphi 0, %s35
      %s55 = sphi 0, %s55
      %s57 = sphi 0, %s55
      %s58 = sphi 0, %s57
      %s72 = sphi 0, %s58
      %s76 = sphi 0, %s76
      %s78 = sphi 0, %s76
      %s79 = sphi 0, %s78
      %s93 = sphi 0, %s79
      %s97 = sphi 0, %s97
      %s99 = sphi 0, %s97
      %s100 = sphi 0, %s99
      %s114 = sphi 0, %s100
      %s118 = sphi 0, %s118
      %s120 = sphi 0, %s118
      %s121 = sphi 0, %s120
      %s135 = sphi 0, %s121
      %s139 = sphi 0, %s139
      %s141 = sphi 0, %s139
      %s142 = sphi 0, %s141
      %s156 = sphi 0, %s142
      %s160 = sphi 0, %s160
      %s162 = sphi 0, %s160
      %s163 = sphi 0, %s162
      %s177 = sphi 0, %s163
      %s181 = sphi 0, %s181
      %s183 = sphi 0, %s181
      %s184 = sphi 0, %s183
      %s198 = sphi 0, %s184
      %s202 = sphi 0, %s202
      %s204 = sphi 0, %s202
      %s205 = sphi 0, %s204
      %s219 = sphi 0, %s205
      %s225 = sphi 0, %s227
      %s228 = sphi 0, %s225
      %s229 = sphi 0, %s228
      %s245 = sphi 0, %s229
    $region4: #{tpu_custom_call.1} parent=1 // loop_header_branch
      %24 = sbr.rel (%p22) target = $region8
    $region5: #{tpu_custom_call.1} parent=1 // loop_body
      %s26 = ssub.s32 %s21, 1
      %s27 = ssub.s32 %s21, 2
      %s28 = sadd.s32 %s21, 1
      %s29 = ssub.s32 %s21, %s28
      %p30 = scmp.eq.s32.totalorder %s29, 0
      %s32 = sadd.s32 %s31, 1
      %s33 = scalar_select %p30, %s31, %s32
      %p36 = pneg %p30
      %p37 = scmp.eq.s32.totalorder %s21, 1
      %p38 = por %p36, %p37
      %p39 = scmp.ne.s32.totalorder %s31, %s34
      %p40 = scmp.eq.s32.totalorder %s21, 0
      %p41 = por %p39, %p40
      %p42 = scmp.ne.s32.totalorder %s31, %s34
      %p43 = scmp.eq.s32.totalorder %s26, 1
      %p44 = por %p42, %p43
      %p45 = scmp.ne.s32.totalorder %s34, %s35
      %p46 = scmp.eq.s32.totalorder %s26, 0
      %p47 = por %p45, %p46
      %p48 = scmp.ne.s32.totalorder %s34, %s35
      %p49 = scmp.eq.s32.totalorder %s27, 1
      %p50 = por %p48, %p49
      %p52 = scmp.ne.s32.totalorder %s35, %s51
      %p53 = scmp.eq.s32.totalorder %s27, 0
      %p54 = por %p52, %p53
      %s56 = sadd.s32 %s55, 1
      %p59 = scmp.eq.s32.totalorder %s21, 1
      %p60 = scmp.ne.s32.totalorder %s55, %s57
      %p61 = scmp.eq.s32.totalorder %s21, 0
      %p62 = por %p60, %p61
      %p63 = scmp.ne.s32.totalorder %s55, %s57
      %p64 = scmp.eq.s32.totalorder %s26, 1
      %p65 = por %p63, %p64
      %p66 = scmp.ne.s32.totalorder %s57, %s58
      %p67 = scmp.eq.s32.totalorder %s26, 0
      %p68 = por %p66, %p67
      %p69 = scmp.ne.s32.totalorder %s57, %s58
      %p70 = scmp.eq.s32.totalorder %s27, 1
      %p71 = por %p69, %p70
      %p73 = scmp.ne.s32.totalorder %s58, %s72
      %p74 = scmp.eq.s32.totalorder %s27, 0
      %p75 = por %p73, %p74
      %s77 = sadd.s32 %s76, 1
      %p80 = scmp.eq.s32.totalorder %s21, 1
      %p81 = scmp.ne.s32.totalorder %s76, %s78
      %p82 = scmp.eq.s32.totalorder %s21, 0
      %p83 = por %p81, %p82
      %p84 = scmp.ne.s32.totalorder %s76, %s78
      %p85 = scmp.eq.s32.totalorder %s26, 1
      %p86 = por %p84, %p85
      %p87 = scmp.ne.s32.totalorder %s78, %s79
      %p88 = scmp.eq.s32.totalorder %s26, 0
      %p89 = por %p87, %p88
      %p90 = scmp.ne.s32.totalorder %s78, %s79
      %p91 = scmp.eq.s32.totalorder %s27, 1
      %p92 = por %p90, %p91
      %p94 = scmp.ne.s32.totalorder %s79, %s93
      %p95 = scmp.eq.s32.totalorder %s27, 0
      %p96 = por %p94, %p95
      %s98 = sadd.s32 %s97, 1
      %p101 = scmp.eq.s32.totalorder %s21, 1
      %p102 = scmp.ne.s32.totalorder %s97, %s99
      %p103 = scmp.eq.s32.totalorder %s21, 0
      %p104 = por %p102, %p103
      %p105 = scmp.ne.s32.totalorder %s97, %s99
      %p106 = scmp.eq.s32.totalorder %s26, 1
      %p107 = por %p105, %p106
      %p108 = scmp.ne.s32.totalorder %s99, %s100
      %p109 = scmp.eq.s32.totalorder %s26, 0
      %p110 = por %p108, %p109
      %p111 = scmp.ne.s32.totalorder %s99, %s100
      %p112 = scmp.eq.s32.totalorder %s27, 1
      %p113 = por %p111, %p112
      %p115 = scmp.ne.s32.totalorder %s100, %s114
      %p116 = scmp.eq.s32.totalorder %s27, 0
      %p117 = por %p115, %p116
      %s119 = sadd.s32 %s118, 1
      %p122 = scmp.eq.s32.totalorder %s21, 1
      %p123 = scmp.ne.s32.totalorder %s118, %s120
      %p124 = scmp.eq.s32.totalorder %s21, 0
      %p125 = por %p123, %p124
      %p126 = scmp.ne.s32.totalorder %s118, %s120
      %p127 = scmp.eq.s32.totalorder %s26, 1
      %p128 = por %p126, %p127
      %p129 = scmp.ne.s32.totalorder %s120, %s121
      %p130 = scmp.eq.s32.totalorder %s26, 0
      %p131 = por %p129, %p130
      %p132 = scmp.ne.s32.totalorder %s120, %s121
      %p133 = scmp.eq.s32.totalorder %s27, 1
      %p134 = por %p132, %p133
      %p136 = scmp.ne.s32.totalorder %s121, %s135
      %p137 = scmp.eq.s32.totalorder %s27, 0
      %p138 = por %p136, %p137
      %s140 = sadd.s32 %s139, 1
      %p143 = scmp.eq.s32.totalorder %s21, 1
      %p144 = scmp.ne.s32.totalorder %s139, %s141
      %p145 = scmp.eq.s32.totalorder %s21, 0
      %p146 = por %p144, %p145
      %p147 = scmp.ne.s32.totalorder %s139, %s141
      %p148 = scmp.eq.s32.totalorder %s26, 1
      %p149 = por %p147, %p148
      %p150 = scmp.ne.s32.totalorder %s141, %s142
      %p151 = scmp.eq.s32.totalorder %s26, 0
      %p152 = por %p150, %p151
      %p153 = scmp.ne.s32.totalorder %s141, %s142
      %p154 = scmp.eq.s32.totalorder %s27, 1
      %p155 = por %p153, %p154
      %p157 = scmp.ne.s32.totalorder %s142, %s156
      %p158 = scmp.eq.s32.totalorder %s27, 0
      %p159 = por %p157, %p158
      %s161 = sadd.s32 %s160, 1
      %p164 = scmp.eq.s32.totalorder %s21, 1
      %p165 = scmp.ne.s32.totalorder %s160, %s162
      %p166 = scmp.eq.s32.totalorder %s21, 0
      %p167 = por %p165, %p166
      %p168 = scmp.ne.s32.totalorder %s160, %s162
      %p169 = scmp.eq.s32.totalorder %s26, 1
      %p170 = por %p168, %p169
      %p171 = scmp.ne.s32.totalorder %s162, %s163
      %p172 = scmp.eq.s32.totalorder %s26, 0
      %p173 = por %p171, %p172
      %p174 = scmp.ne.s32.totalorder %s162, %s163
      %p175 = scmp.eq.s32.totalorder %s27, 1
      %p176 = por %p174, %p175
      %p178 = scmp.ne.s32.totalorder %s163, %s177
      %p179 = scmp.eq.s32.totalorder %s27, 0
      %p180 = por %p178, %p179
      %s182 = sadd.s32 %s181, 1
      %p185 = scmp.eq.s32.totalorder %s21, 1
      %p186 = scmp.ne.s32.totalorder %s181, %s183
      %p187 = scmp.eq.s32.totalorder %s21, 0
      %p188 = por %p186, %p187
      %p189 = scmp.ne.s32.totalorder %s181, %s183
      %p190 = scmp.eq.s32.totalorder %s26, 1
      %p191 = por %p189, %p190
      %p192 = scmp.ne.s32.totalorder %s183, %s184
      %p193 = scmp.eq.s32.totalorder %s26, 0
      %p194 = por %p192, %p193
      %p195 = scmp.ne.s32.totalorder %s183, %s184
      %p196 = scmp.eq.s32.totalorder %s27, 1
      %p197 = por %p195, %p196
      %p199 = scmp.ne.s32.totalorder %s184, %s198
      %p200 = scmp.eq.s32.totalorder %s27, 0
      %p201 = por %p199, %p200
      %s203 = sadd.s32 %s202, 1
      %p206 = scmp.eq.s32.totalorder %s21, 1
      %p207 = scmp.ne.s32.totalorder %s202, %s204
      %p208 = scmp.eq.s32.totalorder %s21, 0
      %p209 = por %p207, %p208
      %p210 = scmp.ne.s32.totalorder %s202, %s204
      %p211 = scmp.eq.s32.totalorder %s26, 1
      %p212 = por %p210, %p211
      %p213 = scmp.ne.s32.totalorder %s204, %s205
      %p214 = scmp.eq.s32.totalorder %s26, 0
      %p215 = por %p213, %p214
      %p216 = scmp.ne.s32.totalorder %s204, %s205
      %p217 = scmp.eq.s32.totalorder %s27, 1
      %p218 = por %p216, %p217
      %p220 = scmp.ne.s32.totalorder %s205, %s219
      %p221 = scmp.eq.s32.totalorder %s27, 0
      %p222 = por %p220, %p221
      %s223 = ssub.s32 %s21, %s28
      %p224 = scmp.eq.s32.totalorder %s223, 0
      %s226 = sadd.s32 %s225, 1
      %s227 = scalar_select %p224, %s225, %s226
      %p230 = pneg %p224
      %p231 = scmp.eq.s32.totalorder %s21, 1
      %p232 = por %p230, %p231
      %p233 = scmp.ne.s32.totalorder %s225, %s228
      %p234 = scmp.eq.s32.totalorder %s21, 0
      %p235 = por %p233, %p234
      %p236 = scmp.ne.s32.totalorder %s225, %s228
      %p237 = scmp.eq.s32.totalorder %s26, 1
      %p238 = por %p236, %p237
      %p239 = scmp.ne.s32.totalorder %s228, %s229
      %p240 = scmp.eq.s32.totalorder %s26, 0
      %p241 = por %p239, %p240
      %p242 = scmp.ne.s32.totalorder %s228, %s229
      %p243 = scmp.eq.s32.totalorder %s27, 1
      %p244 = por %p242, %p243
      %p246 = scmp.ne.s32.totalorder %s229, %s245
      %p247 = scmp.eq.s32.totalorder %s27, 0
      %p248 = por %p246, %p247
      %p249 = scmp.le.s32.totalorder 1, %s21
      %p250 = scmp.lt.s32.totalorder %s21, 3
      %p251 = pnand %p249, %p250
      %p252 = pneg %p251
      // Predicated region
      $region9: #{tpu_custom_call.1} parent=5 // pred_check
        _
      $region10: #{tpu_custom_call.1} parent=5 // pred_check_branch
        %254 = sbr.rel (%p251) target = $region12
      $region11: #{tpu_custom_call.1} parent=5 // pred_region
        %s255 = ssub.s32 %s21, 1
        // Predicated region
        $region13: #{tpu_custom_call.1} parent=11 // pred_check
          %p256 = pneg %p68
        $region14: #{tpu_custom_call.1} parent=11 // pred_check_branch
          %258 = sbr.rel (%p256) target = $region16
        $region15: #{tpu_custom_call.1} parent=11 // pred_region
          _
        $region16: #{tpu_custom_call.1} parent=11 // pred_fallthru
          _
        // Predicated region
        $region17: #{tpu_custom_call.1} parent=11 // pred_check
          %p259 = pneg %p89
        $region18: #{tpu_custom_call.1} parent=11 // pred_check_branch
          %261 = sbr.rel (%p259) target = $region20
        $region19: #{tpu_custom_call.1} parent=11 // pred_region
          _
        $region20: #{tpu_custom_call.1} parent=11 // pred_fallthru
          _
        // Predicated region
        $region21: #{tpu_custom_call.1} parent=11 // pred_check
          %p262 = pneg %p110
        $region22: #{tpu_custom_call.1} parent=11 // pred_check_branch
          %264 = sbr.rel (%p262) target = $region24
        $region23: #{tpu_custom_call.1} parent=11 // pred_region
          _
        $region24: #{tpu_custom_call.1} parent=11 // pred_fallthru
          _
        // Predicated region
        $region25: #{tpu_custom_call.1} parent=11 // pred_check
          %p265 = pneg %p131
        $region26: #{tpu_custom_call.1} parent=11 // pred_check_branch
          %267 = sbr.rel (%p265) target = $region28
        $region27: #{tpu_custom_call.1} parent=11 // pred_region
          _
        $region28: #{tpu_custom_call.1} parent=11 // pred_fallthru
          _
        // Predicated region
        $region29: #{tpu_custom_call.1} parent=11 // pred_check
          %p268 = pneg %p152
        $region30: #{tpu_custom_call.1} parent=11 // pred_check_branch
          %270 = sbr.rel (%p268) target = $region32
        $region31: #{tpu_custom_call.1} parent=11 // pred_region
          _
        $region32: #{tpu_custom_call.1} parent=11 // pred_fallthru
          _
        // Predicated region
        $region33: #{tpu_custom_call.1} parent=11 // pred_check
          %p271 = pneg %p173
        $region34: #{tpu_custom_call.1} parent=11 // pred_check_branch
          %273 = sbr.rel (%p271) target = $region36
        $region35: #{tpu_custom_call.1} parent=11 // pred_region
          _
        $region36: #{tpu_custom_call.1} parent=11 // pred_fallthru
          _
        // Predicated region
        $region37: #{tpu_custom_call.1} parent=11 // pred_check
          %p274 = pneg %p194
        $region38: #{tpu_custom_call.1} parent=11 // pred_check_branch
          %276 = sbr.rel (%p274) target = $region40
        $region39: #{tpu_custom_call.1} parent=11 // pred_region
          _
        $region40: #{tpu_custom_call.1} parent=11 // pred_fallthru
          _
        // Predicated region
        $region41: #{tpu_custom_call.1} parent=11 // pred_check
          %p277 = pneg %p215
        $region42: #{tpu_custom_call.1} parent=11 // pred_check_branch
          %279 = sbr.rel (%p277) target = $region44
        $region43: #{tpu_custom_call.1} parent=11 // pred_region
          _
        $region44: #{tpu_custom_call.1} parent=11 // pred_fallthru
          _
      $region12: #{tpu_custom_call.1} parent=5 // pred_fallthru
        _
      %p280 = scmp.lt.s32.totalorder %s21, 2
      // Predicated region
      $region45: #{tpu_custom_call.1} parent=5 // pred_check
        %p281 = pneg %p280
      $region46: #{tpu_custom_call.1} parent=5 // pred_check_branch
        %283 = sbr.rel (%p281) target = $region48
      $region47: #{tpu_custom_call.1} parent=5 // pred_region
        // Predicated region
        $region49: #{tpu_custom_call.1} parent=47 // pred_check
          %p284 = pneg %p41
        $region50: #{tpu_custom_call.1} parent=47 // pred_check_branch
          %286 = sbr.rel (%p284) target = $region52
        $region51: #{tpu_custom_call.1} parent=47 // pred_region
          %s287 = sand.u32 %s31, 1
          %s288 = scalar_lea.sflag [#allocation5], %s287
          %s289 = sand.u32 %s31, 1
          %s290 = smul.addr %s289, 64
          %s291 = scalar_lea.vmem [#allocation4], %s290
          %s293 = ssub.s32 1024, 1024
          %294 = vsyncadd %s288, %s293
          %s295 = smul.addr %s21, 8
          %s296 = smul.addr %s295, 128
          %s297 = scalar_lea.hbm %s0, %s296
          %s298 = sshll.u32 %s291, 4
          %s299 = int_to_ptr.vmem [resolvable:$true] %s298
          %304 = dma.hbm_to_vmem [thread:$0]  %s297, 1024, %s299, %s288, 256, 256, 16
        $region52: #{tpu_custom_call.1} parent=47 // pred_fallthru
          _
      $region48: #{tpu_custom_call.1} parent=5 // pred_fallthru
        _
      %p305 = scmp.le.s32.totalorder 1, %s21
      %p306 = scmp.lt.s32.totalorder %s21, 3
      %p307 = pnand %p305, %p306
      %p308 = pneg %p307
      // Predicated region
      $region53: #{tpu_custom_call.1} parent=5 // pred_check
        _
      $region54: #{tpu_custom_call.1} parent=5 // pred_check_branch
        %310 = sbr.rel (%p307) target = $region56
      $region55: #{tpu_custom_call.1} parent=5 // pred_region
        %s311 = ssub.s32 %s21, 1
        %s312 = sand.u32 %s34, 1
        %s313 = scalar_lea.sflag [#allocation5], %s312
        %s314 = sand.u32 %s34, 1
        %s315 = smul.addr %s314, 64
        %s316 = scalar_lea.vmem [#allocation4], %s315
        // Predicated region
        $region57: #{tpu_custom_call.1} parent=55 // pred_check
          %p317 = pneg %p47
        $region58: #{tpu_custom_call.1} parent=55 // pred_check_branch
          %319 = sbr.rel (%p317) target = $region60
        $region59: #{tpu_custom_call.1} parent=55 // pred_region
          %320 = dma.done %s313, 1024
        $region60: #{tpu_custom_call.1} parent=55 // pred_fallthru
          _
        %s321 = sand.u32 %s34, 1
        %s322 = scalar_lea.sflag [#allocation5], %s321
        %s323 = sand.u32 %s34, 1
        %s324 = smul.addr %s323, 64
        %s325 = scalar_lea.vmem [#allocation4], %s324
        %p326 = pneg %p47
        %p327 = pneg %p44
        %p328 = pneg %p68
        %p329 = pneg %p65
        %p330 = pneg %p89
        %p331 = pneg %p86
        %p332 = pneg %p110
        %p333 = pneg %p107
        %p334 = pneg %p131
        %p335 = pneg %p128
        %p336 = pneg %p152
        %p337 = pneg %p149
        %p338 = pneg %p173
        %p339 = pneg %p170
        %p340 = pneg %p194
        %p341 = pneg %p191
        %p342 = pneg %p215
        %p343 = pneg %p212
        %p344 = pneg %p241
        %p345 = pneg %p238
        %s346 = sand.u32 %s228, 1
        %s347 = scalar_lea.sflag [#allocation6], %s346
        %s348 = sand.u32 %s228, 1
        %s349 = smul.addr %s348, 64
        %s350 = scalar_lea.vmem [#allocation7], %s349
        %v352 = vld [vmem:[%s316] sm:$0xff]
        %v353 = vld [vmem:[%s316 + $0x8] sm:$0xff]
        %v354 = vld [vmem:[%s316 + $0x10] sm:$0xff]
        %v355 = vld [vmem:[%s316 + $0x18] sm:$0xff]
        %v356 = vld [vmem:[%s316 + $0x20] sm:$0xff]
        %v357 = vld [vmem:[%s316 + $0x28] sm:$0xff]
        %v358 = vld [vmem:[%s316 + $0x30] sm:$0xff]
        %v359 = vld [vmem:[%s316 + $0x38] sm:$0xff]
        %v360 = vadd.f32 %v352, %v353
        %361 = vadd.xlane.f32.xlu0 %v360
        %v362 = vpop.xlane.xlu0 %361
        %v363 = vadd.f32 %v354, %v355
        %364 = vadd.xlane.f32.xlu0 %v363
        %v365 = vpop.xlane.xlu0 %364
        %v366 = vadd.f32 %v356, %v357
        %367 = vadd.xlane.f32.xlu0 %v366
        %v368 = vpop.xlane.xlu0 %367
        %v369 = vadd.f32 %v358, %v359
        %370 = vadd.xlane.f32.xlu0 %v369
        %v371 = vpop.xlane.xlu0 %370
        %v372 = vmul.f32 %v352, %v352
        %v373 = vmul.f32 %v353, %v353
        %v374 = vmul.f32 %v354, %v354
        %v375 = vmul.f32 %v355, %v355
        %v376 = vmul.f32 %v356, %v356
        %v377 = vmul.f32 %v357, %v357
        %v378 = vmul.f32 %v358, %v358
        %v379 = vmul.f32 %v359, %v359
        %v380 = vadd.f32 %v372, %v373
        %381 = vadd.xlane.f32.xlu0 %v380
        %v382 = vpop.xlane.xlu0 %381
        %v383 = vadd.f32 %v374, %v375
        %384 = vadd.xlane.f32.xlu0 %v383
        %v385 = vpop.xlane.xlu0 %384
        %v386 = vadd.f32 %v376, %v377
        %387 = vadd.xlane.f32.xlu0 %v386
        %v388 = vpop.xlane.xlu0 %387
        %v389 = vadd.f32 %v378, %v379
        %390 = vadd.xlane.f32.xlu0 %v389
        %v391 = vpop.xlane.xlu0 %390
        %vm392 = vcmask 7168
        %v393 = vsel %vm392, %v362, %v382
        %v394 = vsel %vm392, %v365, %v385
        %v395 = vsel %vm392, %v368, %v388
        %v396 = vsel %vm392, %v371, %v391
        %v397 = vmul.f32 %v393, 0.00390625
        %v398 = vmul.f32 %v394, 0.00390625
        %v399 = vmul.f32 %v395, 0.00390625
        %v400 = vmul.f32 %v396, 0.00390625
        %v401 = vld [vmem:[%s1] sm:$0xff]
        %v402 = vld [vmem:[%s1 + $0x8] sm:$0xff]
        %v403 = vld [vmem:[%s1 + $0x10] sm:$0xff]
        %v404 = vld [vmem:[%s1 + $0x18] sm:$0xff]
        %vm405 = vcmask 261120
        %v407 = vsel %vm405, %v401, 0
        %v410 = vsel %vm405, %v402, 0
        %v413 = vsel %vm405, %v403, 0
        %v416 = vsel %vm405, %v404, 0
        %418 = vmatprep.subr.mxu0 0.0
        %419 = vmatpush1.msra.mxu0 %v397
        %420 = vmatprep.subr.mxu0 0.0
        %421 = vmatpush1.msra.mxu0 %v398
        %422 = vmatprep.subr.mxu0 0.0
        %423 = vmatpush1.msra.mxu0 %v399
        %424 = vmatprep.subr.mxu0 0.0
        %425 = vmatpush1.msra.mxu0 %v400
        %426 = vmatprep.subr.mxu0 0.0
        %427 = vmatpush1.msra.mxu0 0.0
        %428 = vmatprep.subr.mxu0 0.0
        %429 = vmatpush1.msra.mxu0 0.0
        %430 = vmatprep.subr.mxu0 0.0
        %431 = vmatpush1.msra.mxu0 0.0
        %432 = vmatprep.subr.mxu0 0.0
        %433 = vmatpush1.msra.mxu0 0.0
        %434 = vmatprep.subr.mxu0 0.0
        %435 = vmatpush1.msra.mxu0 0.0
        %436 = vmatprep.subr.mxu0 0.0
        %437 = vmatpush1.msra.mxu0 0.0
        %438 = vmatprep.subr.mxu0 0.0
        %439 = vmatpush1.msra.mxu0 0.0
        %440 = vmatprep.subr.mxu0 0.0
        %441 = vmatpush1.msra.mxu0 0.0
        %442 = vmatprep.subr.mxu0 0.0
        %443 = vmatpush1.msra.mxu0 0.0
        %444 = vmatprep.subr.mxu0 0.0
        %445 = vmatpush1.msra.mxu0 0.0
        %446 = vmatprep.subr.mxu0 0.0
        %447 = vmatpush1.msra.mxu0 0.0
        %448 = vmatprep.subr.mxu0 0.0
        %449 = vmatpush1.msra.mxu0 0.0
        %450 = vmatprep.subr.mxu0 0.0
        %451 = vmatpush1.msra.mxu0 0.0
        %452 = vmatprep.subr.mxu0 0.0
        %453 = vmatpush1.msra.mxu0 0.0
        %454 = vmatprep.subr.mxu0 0.0
        %455 = vmatpush1.msra.mxu0 0.0
        %456 = vmatprep.subr.mxu0 0.0
        %457 = vmatpush1.msra.mxu0 0.0
        %458 = vmatprep.subr.mxu0 0.0
        %459 = vmatpush1.msra.mxu0 0.0
        %460 = vmatprep.subr.mxu0 0.0
        %461 = vmatpush1.msra.mxu0 0.0
        %462 = vmatprep.subr.mxu0 0.0
        %463 = vmatpush1.msra.mxu0 0.0
        %464 = vmatprep.subr.mxu0 0.0
        %465 = vmatpush1.msra.mxu0 0.0
        %466 = vmatprep.subr.mxu0 0.0
        %467 = vmatpush1.msra.mxu0 0.0
        %468 = vmatprep.subr.mxu0 0.0
        %469 = vmatpush1.msra.mxu0 0.0
        %470 = vmatprep.subr.mxu0 0.0
        %471 = vmatpush1.msra.mxu0 0.0
        %472 = vmatprep.subr.mxu0 0.0
        %473 = vmatpush1.msra.mxu0 0.0
        %474 = vmatprep.subr.mxu0 0.0
        %475 = vmatpush1.msra.mxu0 0.0
        %476 = vmatprep.subr.mxu0 0.0
        %477 = vmatpush1.msra.mxu0 0.0
        %478 = vmatprep.subr.mxu0 0.0
        %479 = vmatpush1.msra.mxu0 0.0
        %480 = vmatprep.subr.mxu0 0.0
        %481 = vmatpush1.msra.mxu0 0.0
        %482 = vmatprep.mubr.f32.mxu0 0.0
        %483 = vmatmul.mubr.f32.gmra.mrb[0].mxu0 %v407
        %v484 = vpop.f32.mrb[0].mxu0
        %v485 = vadd.f32 0.0, %v484
        %v486 = vpop.f32.mrb[0].mxu0
        %487 = vmatprep.mubr.f32.mxu0 0.0
        %488 = vmatmul.mubr.f32.gmra.mrb[0].mxu0 %v410
        %v489 = vpop.f32.mrb[0].mxu0
        %v490 = vadd.f32 0.0, %v489
        %v491 = vpop.f32.mrb[0].mxu0
        %492 = vmatprep.mubr.f32.mxu0 0.0
        %493 = vmatmul.mubr.f32.gmra.mrb[0].mxu0 %v413
        %v494 = vpop.f32.mrb[0].mxu0
        %v495 = vadd.f32 0.0, %v494
        %v496 = vpop.f32.mrb[0].mxu0
        %497 = vmatprep.mubr.f32.mxu0 0.0
        %498 = vmatmul.mubr.f32.gmra.mrb[0].mxu0 %v416
        %v499 = vpop.f32.mrb[0].mxu0
        %v500 = vadd.f32 0.0, %v499
        %v501 = vpop.f32.mrb[0].mxu0
        %502 = vdwg.mxu0
        %v503 = vmul.f32 %v485, %v485
        %v504 = vmul.f32 %v490, %v490
        %v505 = vmul.f32 %v495, %v495
        %v506 = vmul.f32 %v500, %v500
        %511 = vrot.lane.b32.xlu0 %v503, 1
        %v512 = vpop.permute.xlu0 %511
        %513 = vrot.lane.b32.xlu0 %v504, 1
        %v514 = vpop.permute.xlu0 %513
        %515 = vrot.lane.b32.xlu0 %v505, 1
        %v516 = vpop.permute.xlu0 %515
        %517 = vrot.lane.b32.xlu0 %v506, 1
        %v518 = vpop.permute.xlu0 %517
        %v523 = vsub.f32 %v485, %v512
        %v524 = vsub.f32 %v490, %v514
        %v525 = vsub.f32 %v495, %v516
        %v526 = vsub.f32 %v500, %v518
        %v527 = vmax.f32 %v523, 0.0
        %v528 = vmax.f32 %v524, 0.0
        %v529 = vmax.f32 %v525, 0.0
        %v530 = vmax.f32 %v526, 0.0
        %v531 = vadd.f32 %v527, 1e-05
        %v532 = vadd.f32 %v528, 1e-05
        %v533 = vadd.f32 %v529, 1e-05
        %v534 = vadd.f32 %v530, 1e-05
        %v535 = vrsqrt.pop %v531
        %v536 = vrsqrt.pop %v532
        %v537 = vrsqrt.pop %v533
        %v538 = vrsqrt.pop %v534
        %540 = vset.pattern.permute.xlu0 0
        %541 = vperm.xlu0 %540, %v485
        %v542 = vpop.permute.xlu0 %541
        %545 = vset.pattern.permute.xlu0 0
        %546 = vperm.xlu0 %545, %v490
        %v547 = vpop.permute.xlu0 %546
        %550 = vset.pattern.permute.xlu0 0
        %551 = vperm.xlu0 %550, %v495
        %v552 = vpop.permute.xlu0 %551
        %555 = vset.pattern.permute.xlu0 0
        %556 = vperm.xlu0 %555, %v500
        %v557 = vpop.permute.xlu0 %556
        %v559 = vsub.f32 %v352, %v542
        %v560 = vsub.f32 %v353, %v542
        %v561 = vsub.f32 %v354, %v547
        %v562 = vsub.f32 %v355, %v547
        %v563 = vsub.f32 %v356, %v552
        %v564 = vsub.f32 %v357, %v552
        %v565 = vsub.f32 %v358, %v557
        %v566 = vsub.f32 %v359, %v557
        %568 = vset.pattern.permute.xlu0 1
        %569 = vperm.xlu0 %568, %v535
        %v570 = vpop.permute.xlu0 %569
        %573 = vset.pattern.permute.xlu0 1
        %574 = vperm.xlu0 %573, %v536
        %v575 = vpop.permute.xlu0 %574
        %578 = vset.pattern.permute.xlu0 1
        %579 = vperm.xlu0 %578, %v537
        %v580 = vpop.permute.xlu0 %579
        %583 = vset.pattern.permute.xlu0 1
        %584 = vperm.xlu0 %583, %v538
        %v585 = vpop.permute.xlu0 %584
        %v587 = vmul.f32 %v559, %v570
        %v588 = vmul.f32 %v560, %v570
        %v589 = vmul.f32 %v561, %v575
        %v590 = vmul.f32 %v562, %v575
        %v591 = vmul.f32 %v563, %v580
        %v592 = vmul.f32 %v564, %v580
        %v593 = vmul.f32 %v565, %v585
        %v594 = vmul.f32 %v566, %v585
        %v595 = vld [vmem:[%s2] sm:$0xff]
        %v596 = vld [vmem:[%s2 + $0x8] sm:$0xff]
        %v597 = vld [vmem:[%s2 + $0x10] sm:$0xff]
        %v598 = vld [vmem:[%s2 + $0x18] sm:$0xff]
        %600 = vset.pattern.permute.xlu0 0
        %601 = vperm.xlu0 %600, %v595
        %v602 = vpop.permute.xlu0 %601
        %605 = vset.pattern.permute.xlu0 0
        %606 = vperm.xlu0 %605, %v596
        %v607 = vpop.permute.xlu0 %606
        %610 = vset.pattern.permute.xlu0 0
        %611 = vperm.xlu0 %610, %v597
        %v612 = vpop.permute.xlu0 %611
        %615 = vset.pattern.permute.xlu0 0
        %616 = vperm.xlu0 %615, %v598
        %v617 = vpop.permute.xlu0 %616
        %v619 = vmul.f32 %v587, %v602
        %v620 = vmul.f32 %v588, %v602
        %v621 = vmul.f32 %v589, %v607
        %v622 = vmul.f32 %v590, %v607
        %v623 = vmul.f32 %v591, %v612
        %v624 = vmul.f32 %v592, %v612
        %v625 = vmul.f32 %v593, %v617
        %v626 = vmul.f32 %v594, %v617
        %v627 = vld [vmem:[%s3] sm:$0xff]
        %v628 = vld [vmem:[%s3 + $0x8] sm:$0xff]
        %v629 = vld [vmem:[%s3 + $0x10] sm:$0xff]
        %v630 = vld [vmem:[%s3 + $0x18] sm:$0xff]
        %632 = vset.pattern.permute.xlu0 0
        %633 = vperm.xlu0 %632, %v627
        %v634 = vpop.permute.xlu0 %633
        %637 = vset.pattern.permute.xlu0 0
        %638 = vperm.xlu0 %637, %v628
        %v639 = vpop.permute.xlu0 %638
        %642 = vset.pattern.permute.xlu0 0
        %643 = vperm.xlu0 %642, %v629
        %v644 = vpop.permute.xlu0 %643
        %647 = vset.pattern.permute.xlu0 0
        %648 = vperm.xlu0 %647, %v630
        %v649 = vpop.permute.xlu0 %648
        %v651 = vadd.f32 %v619, %v634
        %v652 = vadd.f32 %v620, %v634
        %v653 = vadd.f32 %v621, %v639
        %v654 = vadd.f32 %v622, %v639
        %v655 = vadd.f32 %v623, %v644
        %v656 = vadd.f32 %v624, %v644
        %v657 = vadd.f32 %v625, %v649
        %v658 = vadd.f32 %v626, %v649
        %v659 = vpack.c.bf16 %v653, %v651
        %v660 = vpack.c.bf16 %v654, %v652
        %v661 = vpack.c.bf16 %v657, %v655
        %v662 = vpack.c.bf16 %v658, %v656
        %v663 = vld [vmem:[%s4] sm:$0xf]
        %v664 = vld [vmem:[%s4 + $0x4] sm:$0xf]
        %v665 = vld [vmem:[%s4 + $0x8] sm:$0xf]
        %v666 = vld [vmem:[%s4 + $0xc] sm:$0xf]
        %v671 = vunpack.c.l.b16 %v663
        %v672 = vunpack.c.l.b16 %v664
        %v673 = vunpack.c.l.b16 %v665
        %v674 = vunpack.c.l.b16 %v666
        %v675 = vpack.c.b16 %v672, %v671
        %v676 = vpack.c.b16 %v674, %v673
        %v678 = vsel %vm405, %v675, 0
        %v681 = vsel %vm405, %v676, 0
        %683 = vmatprep.subr.bf16.mxu0 %v660
        %684 = vmatpush1.bf16.msra.mxu0 %v659
        %685 = vmatprep.subr.bf16.mxu0 %v662
        %686 = vmatpush1.bf16.msra.mxu0 %v661
        %687 = vmatprep.subr.bf16.mxu0 0
        %688 = vmatpush1.bf16.msra.mxu0 0
        %689 = vmatprep.subr.bf16.mxu0 0
        %690 = vmatpush1.bf16.msra.mxu0 0
        %691 = vmatprep.subr.bf16.mxu0 0
        %692 = vmatpush1.bf16.msra.mxu0 0
        %693 = vmatprep.subr.bf16.mxu0 0
        %694 = vmatpush1.bf16.msra.mxu0 0
        %695 = vmatprep.subr.bf16.mxu0 0
        %696 = vmatpush1.bf16.msra.mxu0 0
        %697 = vmatprep.subr.bf16.mxu0 0
        %698 = vmatpush1.bf16.msra.mxu0 0
        %699 = vmatprep.subr.bf16.mxu0 0
        %700 = vmatpush1.bf16.msra.mxu0 0
        %701 = vmatprep.subr.bf16.mxu0 0
        %702 = vmatpush1.bf16.msra.mxu0 0
        %703 = vmatprep.subr.bf16.mxu0 0
        %704 = vmatpush1.bf16.msra.mxu0 0
        %705 = vmatprep.subr.bf16.mxu0 0
        %706 = vmatpush1.bf16.msra.mxu0 0
        %707 = vmatprep.subr.bf16.mxu0 0
        %708 = vmatpush1.bf16.msra.mxu0 0
        %709 = vmatprep.subr.bf16.mxu0 0
        %710 = vmatpush1.bf16.msra.mxu0 0
        %711 = vmatprep.subr.bf16.mxu0 0
        %712 = vmatpush1.bf16.msra.mxu0 0
        %713 = vmatprep.subr.bf16.mxu0 0
        %714 = vmatpush1.bf16.msra.mxu0 0
        %715 = vmatprep.mubr.bf16.mxu0 0
        %716 = vmatmul.mubr.bf16.gmra.mrb[0].mxu0 %v678
        %v717 = vpop.f32.mrb[0].mxu0
        %v718 = vadd.f32 0.0, %v717
        %v719 = vpop.f32.mrb[0].mxu0
        %v720 = vadd.f32 0.0, %v719
        %v721 = vpop.f32.mrb[0].mxu0
        %v722 = vadd.f32 0.0, %v721
        %v723 = vpop.f32.mrb[0].mxu0
        %v724 = vadd.f32 0.0, %v723
        %725 = vmatprep.mubr.bf16.mxu0 0
        %726 = vmatmul.mubr.bf16.gmra.mrb[0].mxu0 %v681
        %v727 = vpop.f32.mrb[0].mxu0
        %v728 = vadd.f32 0.0, %v727
        %v729 = vpop.f32.mrb[0].mxu0
        %v730 = vadd.f32 0.0, %v729
        %v731 = vpop.f32.mrb[0].mxu0
        %v732 = vadd.f32 0.0, %v731
        %v733 = vpop.f32.mrb[0].mxu0
        %v734 = vadd.f32 0.0, %v733
        %735 = vdwg.mxu0
        %v736 = vpack.c.bf16 %v722, %v718
        %v737 = vpack.c.bf16 %v724, %v720
        %v738 = vpack.c.bf16 %v732, %v728
        %v739 = vpack.c.bf16 %v734, %v730
        %740 = vst [vmem:[#allocation2] sm:$0xff] %v736
        %741 = vst [vmem:[#allocation2 + $0x8] sm:$0xff] %v737
        %742 = vst [vmem:[#allocation2 + $0x10] sm:$0xff] %v738
        %743 = vst [vmem:[#allocation2 + $0x18] sm:$0xff] %v739
        %v744 = vld [vmem:[%s5] sm:$0xf]
        %v745 = vld [vmem:[%s5 + $0x4] sm:$0xf]
        %v746 = vld [vmem:[%s5 + $0x8] sm:$0xf]
        %v747 = vld [vmem:[%s5 + $0xc] sm:$0xf]
        %v752 = vunpack.c.l.b16 %v744
        %v753 = vunpack.c.l.b16 %v745
        %v754 = vunpack.c.l.b16 %v746
        %v755 = vunpack.c.l.b16 %v747
        %v756 = vpack.c.b16 %v753, %v752
        %v757 = vpack.c.b16 %v755, %v754
        %v759 = vsel %vm405, %v756, 0
        %v762 = vsel %vm405, %v757, 0
        %764 = vmatprep.subr.bf16.mxu0 %v660
        %765 = vmatpush1.bf16.msra.mxu0 %v659
        %766 = vmatprep.subr.bf16.mxu0 %v662
        %767 = vmatpush1.bf16.msra.mxu0 %v661
        %768 = vmatprep.subr.bf16.mxu0 0
        %769 = vmatpush1.bf16.msra.mxu0 0
        %770 = vmatprep.subr.bf16.mxu0 0
        %771 = vmatpush1.bf16.msra.mxu0 0
        %772 = vmatprep.subr.bf16.mxu0 0
        %773 = vmatpush1.bf16.msra.mxu0 0
        %774 = vmatprep.subr.bf16.mxu0 0
        %775 = vmatpush1.bf16.msra.mxu0 0
        %776 = vmatprep.subr.bf16.mxu0 0
        %777 = vmatpush1.bf16.msra.mxu0 0
        %778 = vmatprep.subr.bf16.mxu0 0
        %779 = vmatpush1.bf16.msra.mxu0 0
        %780 = vmatprep.subr.bf16.mxu0 0
        %781 = vmatpush1.bf16.msra.mxu0 0
        %782 = vmatprep.subr.bf16.mxu0 0
        %783 = vmatpush1.bf16.msra.mxu0 0
        %784 = vmatprep.subr.bf16.mxu0 0
        %785 = vmatpush1.bf16.msra.mxu0 0
        %786 = vmatprep.subr.bf16.mxu0 0
        %787 = vmatpush1.bf16.msra.mxu0 0
        %788 = vmatprep.subr.bf16.mxu0 0
        %789 = vmatpush1.bf16.msra.mxu0 0
        %790 = vmatprep.subr.bf16.mxu0 0
        %791 = vmatpush1.bf16.msra.mxu0 0
        %792 = vmatprep.subr.bf16.mxu0 0
        %793 = vmatpush1.bf16.msra.mxu0 0
        %794 = vmatprep.subr.bf16.mxu0 0
        %795 = vmatpush1.bf16.msra.mxu0 0
        %796 = vmatprep.mubr.bf16.mxu0 0
        %797 = vmatmul.mubr.bf16.gmra.mrb[0].mxu0 %v759
        %v798 = vpop.f32.mrb[0].mxu0
        %v799 = vadd.f32 0.0, %v798
        %v800 = vpop.f32.mrb[0].mxu0
        %v801 = vadd.f32 0.0, %v800
        %v802 = vpop.f32.mrb[0].mxu0
        %v803 = vadd.f32 0.0, %v802
        %v804 = vpop.f32.mrb[0].mxu0
        %v805 = vadd.f32 0.0, %v804
        %806 = vmatprep.mubr.bf16.mxu0 0
        %807 = vmatmul.mubr.bf16.gmra.mrb[0].mxu0 %v762
        %v808 = vpop.f32.mrb[0].mxu0
        %v809 = vadd.f32 0.0, %v808
        %v810 = vpop.f32.mrb[0].mxu0
        %v811 = vadd.f32 0.0, %v810
        %v812 = vpop.f32.mrb[0].mxu0
        %v813 = vadd.f32 0.0, %v812
        %v814 = vpop.f32.mrb[0].mxu0
        %v815 = vadd.f32 0.0, %v814
        %816 = vdwg.mxu0
        %v817 = vpack.c.bf16 %v803, %v799
        %v818 = vpack.c.bf16 %v805, %v801
        %v819 = vpack.c.bf16 %v813, %v809
        %v820 = vpack.c.bf16 %v815, %v811
        %v821 = vld [vmem:[%s6] sm:$0xf]
        %v822 = vld [vmem:[%s6 + $0x4] sm:$0xf]
        %v823 = vld [vmem:[%s6 + $0x8] sm:$0xf]
        %v824 = vld [vmem:[%s6 + $0xc] sm:$0xf]
        %v829 = vunpack.c.l.b16 %v821
        %v830 = vunpack.c.l.b16 %v822
        %v831 = vunpack.c.l.b16 %v823
        %v832 = vunpack.c.l.b16 %v824
        %v833 = vpack.c.b16 %v830, %v829
        %v834 = vpack.c.b16 %v832, %v831
        %v836 = vsel %vm405, %v833, 0
        %v839 = vsel %vm405, %v834, 0
        %841 = vmatprep.subr.bf16.mxu0 %v660
        %842 = vmatpush1.bf16.msra.mxu0 %v659
        %843 = vmatprep.subr.bf16.mxu0 %v662
        %844 = vmatpush1.bf16.msra.mxu0 %v661
        %845 = vmatprep.subr.bf16.mxu0 0
        %846 = vmatpush1.bf16.msra.mxu0 0
        %847 = vmatprep.subr.bf16.mxu0 0
        %848 = vmatpush1.bf16.msra.mxu0 0
        %849 = vmatprep.subr.bf16.mxu0 0
        %850 = vmatpush1.bf16.msra.mxu0 0
        %851 = vmatprep.subr.bf16.mxu0 0
        %852 = vmatpush1.bf16.msra.mxu0 0
        %853 = vmatprep.subr.bf16.mxu0 0
        %854 = vmatpush1.bf16.msra.mxu0 0
        %855 = vmatprep.subr.bf16.mxu0 0
        %856 = vmatpush1.bf16.msra.mxu0 0
        %857 = vmatprep.subr.bf16.mxu0 0
        %858 = vmatpush1.bf16.msra.mxu0 0
        %859 = vmatprep.subr.bf16.mxu0 0
        %860 = vmatpush1.bf16.msra.mxu0 0
        %861 = vmatprep.subr.bf16.mxu0 0
        %862 = vmatpush1.bf16.msra.mxu0 0
        %863 = vmatprep.subr.bf16.mxu0 0
        %864 = vmatpush1.bf16.msra.mxu0 0
        %865 = vmatprep.subr.bf16.mxu0 0
        %866 = vmatpush1.bf16.msra.mxu0 0
        %867 = vmatprep.subr.bf16.mxu0 0
        %868 = vmatpush1.bf16.msra.mxu0 0
        %869 = vmatprep.subr.bf16.mxu0 0
        %870 = vmatpush1.bf16.msra.mxu0 0
        %871 = vmatprep.subr.bf16.mxu0 0
        %872 = vmatpush1.bf16.msra.mxu0 0
        %873 = vmatprep.mubr.bf16.mxu0 0
        %874 = vmatmul.mubr.bf16.gmra.mrb[0].mxu0 %v836
        %v875 = vpop.f32.mrb[0].mxu0
        %v876 = vadd.f32 0.0, %v875
        %v877 = vpop.f32.mrb[0].mxu0
        %v878 = vadd.f32 0.0, %v877
        %v879 = vpop.f32.mrb[0].mxu0
        %v880 = vadd.f32 0.0, %v879
        %v881 = vpop.f32.mrb[0].mxu0
        %v882 = vadd.f32 0.0, %v881
        %883 = vmatprep.mubr.bf16.mxu0 0
        %884 = vmatmul.mubr.bf16.gmra.mrb[0].mxu0 %v839
        %v885 = vpop.f32.mrb[0].mxu0
        %v886 = vadd.f32 0.0, %v885
        %v887 = vpop.f32.mrb[0].mxu0
        %v888 = vadd.f32 0.0, %v887
        %v889 = vpop.f32.mrb[0].mxu0
        %v890 = vadd.f32 0.0, %v889
        %v891 = vpop.f32.mrb[0].mxu0
        %v892 = vadd.f32 0.0, %v891
        %893 = vdwg.mxu0
        %v894 = vpack.c.bf16 %v880, %v876
        %v895 = vpack.c.bf16 %v882, %v878
        %v896 = vpack.c.bf16 %v890, %v886
        %v897 = vpack.c.bf16 %v892, %v888
        %v898 = vld [vmem:[#allocation2] sm:$0xff]
        %v899 = vld [vmem:[#allocation2 + $0x8] sm:$0xff]
        %900 = vxpose.xlu0.c.b16.start [1/8] %v898, 128
        %901 = vxpose.xlu0.c.b16.cont [2/8] 0, 128
        %902 = vxpose.xlu0.c.b16.cont [3/8] 0, 128
        %903 = vxpose.xlu0.c.b16.cont [4/8] 0, 128
        %904 = vxpose.xlu0.c.b16.cont [5/8] 0, 128
        %905 = vxpose.xlu0.c.b16.cont [6/8] 0, 128
        %906 = vxpose.xlu0.c.b16.cont [7/8] 0, 128
        %907 = vxpose.xlu0.c.b16.end [8/8] 0, 128
        %v908 = vpop.trf.xlu0
        %v909 = vpop.trf.xlu0
        %v910 = vpop.trf.xlu0
        %v911 = vpop.trf.xlu0
        %v912 = vpop.trf.xlu0
        %v913 = vpop.trf.xlu0
        %v914 = vpop.trf.xlu0
        %v915 = vpop.trf.xlu0
        %916 = vxpose.xlu0.c.b16.start [1/8] %v899, 128
        %917 = vxpose.xlu0.c.b16.cont [2/8] 0, 128
        %918 = vxpose.xlu0.c.b16.cont [3/8] 0, 128
        %919 = vxpose.xlu0.c.b16.cont [4/8] 0, 128
        %920 = vxpose.xlu0.c.b16.cont [5/8] 0, 128
        %921 = vxpose.xlu0.c.b16.cont [6/8] 0, 128
        %922 = vxpose.xlu0.c.b16.cont [7/8] 0, 128
        %923 = vxpose.xlu0.c.b16.end [8/8] 0, 128
        %v924 = vpop.trf.xlu0
        %v925 = vpop.trf.xlu0
        %v926 = vpop.trf.xlu0
        %v927 = vpop.trf.xlu0
        %v928 = vpop.trf.xlu0
        %v929 = vpop.trf.xlu0
        %v930 = vpop.trf.xlu0
        %v931 = vpop.trf.xlu0
        %vm932 = vcmask 130048
        %v934 = vsel %vm932, %v908, 0
        %v937 = vsel %vm932, %v909, 0
        %v940 = vsel %vm932, %v910, 0
        %v943 = vsel %vm932, %v911, 0
        %v946 = vsel %vm932, %v912, 0
        %v949 = vsel %vm932, %v913, 0
        %v952 = vsel %vm932, %v914, 0
        %v955 = vsel %vm932, %v915, 0
        %v958 = vsel %vm932, %v924, 0
        %v961 = vsel %vm932, %v925, 0
        %v964 = vsel %vm932, %v926, 0
        %v967 = vsel %vm932, %v927, 0
        %v970 = vsel %vm932, %v928, 0
        %v973 = vsel %vm932, %v929, 0
        %v976 = vsel %vm932, %v930, 0
        %v979 = vsel %vm932, %v931, 0
        %981 = vmatprep.subr.bf16.mxu0 %v818
        %982 = vmatpush1.bf16.msra.mxu0 %v817
        %983 = vmatprep.subr.bf16.mxu0 0
        %984 = vmatpush1.bf16.msra.mxu0 0
        %985 = vmatprep.subr.bf16.mxu0 0
        %986 = vmatpush1.bf16.msra.mxu0 0
        %987 = vmatprep.subr.bf16.mxu0 0
        %988 = vmatpush1.bf16.msra.mxu0 0
        %989 = vmatprep.subr.bf16.mxu0 0
        %990 = vmatpush1.bf16.msra.mxu0 0
        %991 = vmatprep.subr.bf16.mxu0 0
        %992 = vmatpush1.bf16.msra.mxu0 0
        %993 = vmatprep.subr.bf16.mxu0 0
        %994 = vmatpush1.bf16.msra.mxu0 0
        %995 = vmatprep.subr.bf16.mxu0 0
        %996 = vmatpush1.bf16.msra.mxu0 0
        %997 = vmatprep.subr.bf16.mxu0 0
        %998 = vmatpush1.bf16.msra.mxu0 0
        %999 = vmatprep.subr.bf16.mxu0 0
        %1000 = vmatpush1.bf16.msra.mxu0 0
        %1001 = vmatprep.subr.bf16.mxu0 0
        %1002 = vmatpush1.bf16.msra.mxu0 0
        %1003 = vmatprep.subr.bf16.mxu0 0
        %1004 = vmatpush1.bf16.msra.mxu0 0
        %1005 = vmatprep.subr.bf16.mxu0 0
        %1006 = vmatpush1.bf16.msra.mxu0 0
        %1007 = vmatprep.subr.bf16.mxu0 0
        %1008 = vmatpush1.bf16.msra.mxu0 0
        %1009 = vmatprep.subr.bf16.mxu0 0
        %1010 = vmatpush1.bf16.msra.mxu0 0
        %1011 = vmatprep.subr.bf16.mxu0 0
        %1012 = vmatpush1.bf16.msra.mxu0 0
        %1013 = vmatprep.mubr.bf16.mxu0 0
        %1014 = vmatmul.mubr.bf16.gmra.mrb[0].mxu0 %v934
        %v1015 = vpop.f32.mrb[0].mxu0
        %v1016 = vadd.f32 0.0, %v1015
        %v1017 = vpop.f32.mrb[0].mxu0
        %v1018 = vadd.f32 0.0, %v1017
        %v1019 = vpop.f32.mrb[0].mxu0
        %v1020 = vadd.f32 0.0, %v1019
        %v1021 = vpop.f32.mrb[0].mxu0
        %v1022 = vadd.f32 0.0, %v1021
        %1023 = vmatprep.mubr.bf16.mxu0 0
        %1024 = vmatmul.mubr.bf16.gmra.mrb[0].mxu0 %v937
        %v1025 = vpop.f32.mrb[0].mxu0
        %v1026 = vadd.f32 0.0, %v1025
        %v1027 = vpop.f32.mrb[0].mxu0
        %v1028 = vadd.f32 0.0, %v1027
        %v1029 = vpop.f32.mrb[0].mxu0
        %v1030 = vadd.f32 0.0, %v1029
        %v1031 = vpop.f32.mrb[0].mxu0
        %v1032 = vadd.f32 0.0, %v1031
        %1033 = vmatprep.mubr.bf16.mxu0 0
        %1034 = vmatmul.mubr.bf16.gmra.mrb[0].mxu0 %v940
        %v1035 = vpop.f32.mrb[0].mxu0
        %v1036 = vadd.f32 0.0, %v1035
        %v1037 = vpop.f32.mrb[0].mxu0
        %v1038 = vadd.f32 0.0, %v1037
        %v1039 = vpop.f32.mrb[0].mxu0
        %v1040 = vadd.f32 0.0, %v1039
        %v1041 = vpop.f32.mrb[0].mxu0
        %v1042 = vadd.f32 0.0, %v1041
        %1043 = vmatprep.mubr.bf16.mxu0 0
        %1044 = vmatmul.mubr.bf16.gmra.mrb[0].mxu0 %v943
        %v1045 = vpop.f32.mrb[0].mxu0
        %v1046 = vadd.f32 0.0, %v1045
        %v1047 = vpop.f32.mrb[0].mxu0
        %v1048 = vadd.f32 0.0, %v1047
        %v1049 = vpop.f32.mrb[0].mxu0
        %v1050 = vadd.f32 0.0, %v1049
        %v1051 = vpop.f32.mrb[0].mxu0
        %v1052 = vadd.f32 0.0, %v1051
        %1053 = vmatprep.mubr.bf16.mxu0 0
        %1054 = vmatmul.mubr.bf16.gmra.mrb[0].mxu0 %v946
        %v1055 = vpop.f32.mrb[0].mxu0
        %v1056 = vadd.f32 0.0, %v1055
        %v1057 = vpop.f32.mrb[0].mxu0
        %v1058 = vadd.f32 0.0, %v1057
        %v1059 = vpop.f32.mrb[0].mxu0
        %v1060 = vadd.f32 0.0, %v1059
        %v1061 = vpop.f32.mrb[0].mxu0
        %v1062 = vadd.f32 0.0, %v1061
        %1063 = vmatprep.mubr.bf16.mxu0 0
        %1064 = vmatmul.mubr.bf16.gmra.mrb[0].mxu0 %v949
        %v1065 = vpop.f32.mrb[0].mxu0
        %v1066 = vadd.f32 0.0, %v1065
        %v1067 = vpop.f32.mrb[0].mxu0
        %v1068 = vadd.f32 0.0, %v1067
        %v1069 = vpop.f32.mrb[0].mxu0
        %v1070 = vadd.f32 0.0, %v1069
        %v1071 = vpop.f32.mrb[0].mxu0
        %v1072 = vadd.f32 0.0, %v1071
        %1073 = vmatprep.mubr.bf16.mxu0 0
        %1074 = vmatmul.mubr.bf16.gmra.mrb[0].mxu0 %v952
        %v1075 = vpop.f32.mrb[0].mxu0
        %v1076 = vadd.f32 0.0, %v1075
        %v1077 = vpop.f32.mrb[0].mxu0
        %v1078 = vadd.f32 0.0, %v1077
        %v1079 = vpop.f32.mrb[0].mxu0
        %v1080 = vadd.f32 0.0, %v1079
        %v1081 = vpop.f32.mrb[0].mxu0
        %v1082 = vadd.f32 0.0, %v1081
        %1083 = vmatprep.mubr.bf16.mxu0 0
        %1084 = vmatmul.mubr.bf16.gmra.mrb[0].mxu0 %v955
        %v1085 = vpop.f32.mrb[0].mxu0
        %v1086 = vadd.f32 0.0, %v1085
        %v1087 = vpop.f32.mrb[0].mxu0
        %v1088 = vadd.f32 0.0, %v1087
        %v1089 = vpop.f32.mrb[0].mxu0
        %v1090 = vadd.f32 0.0, %v1089
        %v1091 = vpop.f32.mrb[0].mxu0
        %v1092 = vadd.f32 0.0, %v1091
        %1093 = vmatprep.mubr.bf16.mxu0 0
        %1094 = vmatmul.mubr.bf16.gmra.mrb[0].mxu0 %v958
        %v1095 = vpop.f32.mrb[0].mxu0
        %v1096 = vadd.f32 0.0, %v1095
        %v1097 = vpop.f32.mrb[0].mxu0
        %v1098 = vadd.f32 0.0, %v1097
        %v1099 = vpop.f32.mrb[0].mxu0
        %v1100 = vadd.f32 0.0, %v1099
        %v1101 = vpop.f32.mrb[0].mxu0
        %v1102 = vadd.f32 0.0, %v1101
        %1103 = vmatprep.mubr.bf16.mxu0 0
        %1104 = vmatmul.mubr.bf16.gmra.mrb[0].mxu0 %v961
        %v1105 = vpop.f32.mrb[0].mxu0
        %v1106 = vadd.f32 0.0, %v1105
        %v1107 = vpop.f32.mrb[0].mxu0
        %v1108 = vadd.f32 0.0, %v1107
        %v1109 = vpop.f32.mrb[0].mxu0
        %v1110 = vadd.f32 0.0, %v1109
        %v1111 = vpop.f32.mrb[0].mxu0
        %v1112 = vadd.f32 0.0, %v1111
        %1113 = vmatprep.mubr.bf16.mxu0 0
        %1114 = vmatmul.mubr.bf16.gmra.mrb[0].mxu0 %v964
        %v1115 = vpop.f32.mrb[0].mxu0
        %v1116 = vadd.f32 0.0, %v1115
        %v1117 = vpop.f32.mrb[0].mxu0
        %v1118 = vadd.f32 0.0, %v1117
        %v1119 = vpop.f32.mrb[0].mxu0
        %v1120 = vadd.f32 0.0, %v1119
        %v1121 = vpop.f32.mrb[0].mxu0
        %v1122 = vadd.f32 0.0, %v1121
        %1123 = vmatprep.mubr.bf16.mxu0 0
        %1124 = vmatmul.mubr.bf16.gmra.mrb[0].mxu0 %v967
        %v1125 = vpop.f32.mrb[0].mxu0
        %v1126 = vadd.f32 0.0, %v1125
        %v1127 = vpop.f32.mrb[0].mxu0
        %v1128 = vadd.f32 0.0, %v1127
        %v1129 = vpop.f32.mrb[0].mxu0
        %v1130 = vadd.f32 0.0, %v1129
        %v1131 = vpop.f32.mrb[0].mxu0
        %v1132 = vadd.f32 0.0, %v1131
        %1133 = vmatprep.mubr.bf16.mxu0 0
        %1134 = vmatmul.mubr.bf16.gmra.mrb[0].mxu0 %v970
        %v1135 = vpop.f32.mrb[0].mxu0
        %v1136 = vadd.f32 0.0, %v1135
        %v1137 = vpop.f32.mrb[0].mxu0
        %v1138 = vadd.f32 0.0, %v1137
        %v1139 = vpop.f32.mrb[0].mxu0
        %v1140 = vadd.f32 0.0, %v1139
        %v1141 = vpop.f32.mrb[0].mxu0
        %v1142 = vadd.f32 0.0, %v1141
        %1143 = vmatprep.mubr.bf16.mxu0 0
        %1144 = vmatmul.mubr.bf16.gmra.mrb[0].mxu0 %v973
        %v1145 = vpop.f32.mrb[0].mxu0
        %v1146 = vadd.f32 0.0, %v1145
        %v1147 = vpop.f32.mrb[0].mxu0
        %v1148 = vadd.f32 0.0, %v1147
        %v1149 = vpop.f32.mrb[0].mxu0
        %v1150 = vadd.f32 0.0, %v1149
        %v1151 = vpop.f32.mrb[0].mxu0
        %v1152 = vadd.f32 0.0, %v1151
        %1153 = vmatprep.mubr.bf16.mxu0 0
        %1154 = vmatmul.mubr.bf16.gmra.mrb[0].mxu0 %v976
        %v1155 = vpop.f32.mrb[0].mxu0
        %v1156 = vadd.f32 0.0, %v1155
        %v1157 = vpop.f32.mrb[0].mxu0
        %v1158 = vadd.f32 0.0, %v1157
        %v1159 = vpop.f32.mrb[0].mxu0
        %v1160 = vadd.f32 0.0, %v1159
        %v1161 = vpop.f32.mrb[0].mxu0
        %v1162 = vadd.f32 0.0, %v1161
        %1163 = vmatprep.mubr.bf16.mxu0 0
        %1164 = vmatmul.mubr.bf16.gmra.mrb[0].mxu0 %v979
        %v1165 = vpop.f32.mrb[0].mxu0
        %v1166 = vadd.f32 0.0, %v1165
        %v1167 = vpop.f32.mrb[0].mxu0
        %v1168 = vadd.f32 0.0, %v1167
        %v1169 = vpop.f32.mrb[0].mxu0
        %v1170 = vadd.f32 0.0, %v1169
        %v1171 = vpop.f32.mrb[0].mxu0
        %v1172 = vadd.f32 0.0, %v1171
        %1173 = vdwg.mxu0
        %v1174 = vmax.f32 %v1016, %v1018
        %1175 = vmax.xlane.f32.xlu0 %v1174
        %v1176 = vpop.xlane.xlu0 %1175
        %v1177 = vmax.f32 %v1020, %v1022
        %1178 = vmax.xlane.f32.xlu0 %v1177
        %v1179 = vpop.xlane.xlu0 %1178
        %v1180 = vmax.f32 %v1026, %v1028
        %1181 = vmax.xlane.f32.xlu0 %v1180
        %v1182 = vpop.xlane.xlu0 %1181
        %v1183 = vmax.f32 %v1030, %v1032
        %1184 = vmax.xlane.f32.xlu0 %v1183
        %v1185 = vpop.xlane.xlu0 %1184
        %v1186 = vmax.f32 %v1036, %v1038
        %1187 = vmax.xlane.f32.xlu0 %v1186
        %v1188 = vpop.xlane.xlu0 %1187
        %v1189 = vmax.f32 %v1040, %v1042
        %1190 = vmax.xlane.f32.xlu0 %v1189
        %v1191 = vpop.xlane.xlu0 %1190
        %v1192 = vmax.f32 %v1046, %v1048
        %1193 = vmax.xlane.f32.xlu0 %v1192
        %v1194 = vpop.xlane.xlu0 %1193
        %v1195 = vmax.f32 %v1050, %v1052
        %1196 = vmax.xlane.f32.xlu0 %v1195
        %v1197 = vpop.xlane.xlu0 %1196
        %v1198 = vmax.f32 %v1056, %v1058
        %1199 = vmax.xlane.f32.xlu0 %v1198
        %v1200 = vpop.xlane.xlu0 %1199
        %v1201 = vmax.f32 %v1060, %v1062
        %1202 = vmax.xlane.f32.xlu0 %v1201
        %v1203 = vpop.xlane.xlu0 %1202
        %v1204 = vmax.f32 %v1066, %v1068
        %1205 = vmax.xlane.f32.xlu0 %v1204
        %v1206 = vpop.xlane.xlu0 %1205
        %v1207 = vmax.f32 %v1070, %v1072
        %1208 = vmax.xlane.f32.xlu0 %v1207
        %v1209 = vpop.xlane.xlu0 %1208
        %v1210 = vmax.f32 %v1076, %v1078
        %1211 = vmax.xlane.f32.xlu0 %v1210
        %v1212 = vpop.xlane.xlu0 %1211
        %v1213 = vmax.f32 %v1080, %v1082
        %1214 = vmax.xlane.f32.xlu0 %v1213
        %v1215 = vpop.xlane.xlu0 %1214
        %v1216 = vmax.f32 %v1086, %v1088
        %1217 = vmax.xlane.f32.xlu0 %v1216
        %v1218 = vpop.xlane.xlu0 %1217
        %v1219 = vmax.f32 %v1090, %v1092
        %1220 = vmax.xlane.f32.xlu0 %v1219
        %v1221 = vpop.xlane.xlu0 %1220
        %v1222 = vmax.f32 %v1096, %v1098
        %1223 = vmax.xlane.f32.xlu0 %v1222
        %v1224 = vpop.xlane.xlu0 %1223
        %v1225 = vmax.f32 %v1100, %v1102
        %1226 = vmax.xlane.f32.xlu0 %v1225
        %v1227 = vpop.xlane.xlu0 %1226
        %v1228 = vmax.f32 %v1106, %v1108
        %1229 = vmax.xlane.f32.xlu0 %v1228
        %v1230 = vpop.xlane.xlu0 %1229
        %v1231 = vmax.f32 %v1110, %v1112
        %1232 = vmax.xlane.f32.xlu0 %v1231
        %v1233 = vpop.xlane.xlu0 %1232
        %v1234 = vmax.f32 %v1116, %v1118
        %1235 = vmax.xlane.f32.xlu0 %v1234
        %v1236 = vpop.xlane.xlu0 %1235
        %v1237 = vmax.f32 %v1120, %v1122
        %1238 = vmax.xlane.f32.xlu0 %v1237
        %v1239 = vpop.xlane.xlu0 %1238
        %v1240 = vmax.f32 %v1126, %v1128
        %1241 = vmax.xlane.f32.xlu0 %v1240
        %v1242 = vpop.xlane.xlu0 %1241
        %v1243 = vmax.f32 %v1130, %v1132
        %1244 = vmax.xlane.f32.xlu0 %v1243
        %v1245 = vpop.xlane.xlu0 %1244
        %v1246 = vmax.f32 %v1136, %v1138
        %1247 = vmax.xlane.f32.xlu0 %v1246
        %v1248 = vpop.xlane.xlu0 %1247
        %v1249 = vmax.f32 %v1140, %v1142
        %1250 = vmax.xlane.f32.xlu0 %v1249
        %v1251 = vpop.xlane.xlu0 %1250
        %v1252 = vmax.f32 %v1146, %v1148
        %1253 = vmax.xlane.f32.xlu0 %v1252
        %v1254 = vpop.xlane.xlu0 %1253
        %v1255 = vmax.f32 %v1150, %v1152
        %1256 = vmax.xlane.f32.xlu0 %v1255
        %v1257 = vpop.xlane.xlu0 %1256
        %v1258 = vmax.f32 %v1156, %v1158
        %1259 = vmax.xlane.f32.xlu0 %v1258
        %v1260 = vpop.xlane.xlu0 %1259
        %v1261 = vmax.f32 %v1160, %v1162
        %1262 = vmax.xlane.f32.xlu0 %v1261
        %v1263 = vpop.xlane.xlu0 %1262
        %v1264 = vmax.f32 %v1166, %v1168
        %1265 = vmax.xlane.f32.xlu0 %v1264
        %v1266 = vpop.xlane.xlu0 %1265
        %v1267 = vmax.f32 %v1170, %v1172
        %1268 = vmax.xlane.f32.xlu0 %v1267
        %v1269 = vpop.xlane.xlu0 %1268
        %v1270 = vsub.f32 %v1016, %v1176
        %v1271 = vsub.f32 %v1018, %v1176
        %v1272 = vsub.f32 %v1020, %v1179
        %v1273 = vsub.f32 %v1022, %v1179
        %v1274 = vsub.f32 %v1026, %v1182
        %v1275 = vsub.f32 %v1028, %v1182
        %v1276 = vsub.f32 %v1030, %v1185
        %v1277 = vsub.f32 %v1032, %v1185
        %v1278 = vsub.f32 %v1036, %v1188
        %v1279 = vsub.f32 %v1038, %v1188
        %v1280 = vsub.f32 %v1040, %v1191
        %v1281 = vsub.f32 %v1042, %v1191
        %v1282 = vsub.f32 %v1046, %v1194
        %v1283 = vsub.f32 %v1048, %v1194
        %v1284 = vsub.f32 %v1050, %v1197
        %v1285 = vsub.f32 %v1052, %v1197
        %v1286 = vsub.f32 %v1056, %v1200
        %v1287 = vsub.f32 %v1058, %v1200
        %v1288 = vsub.f32 %v1060, %v1203
        %v1289 = vsub.f32 %v1062, %v1203
        %v1290 = vsub.f32 %v1066, %v1206
        %v1291 = vsub.f32 %v1068, %v1206
        %v1292 = vsub.f32 %v1070, %v1209
        %v1293 = vsub.f32 %v1072, %v1209
        %v1294 = vsub.f32 %v1076, %v1212
        %v1295 = vsub.f32 %v1078, %v1212
        %v1296 = vsub.f32 %v1080, %v1215
        %v1297 = vsub.f32 %v1082, %v1215
        %v1298 = vsub.f32 %v1086, %v1218
        %v1299 = vsub.f32 %v1088, %v1218
        %v1300 = vsub.f32 %v1090, %v1221
        %v1301 = vsub.f32 %v1092, %v1221
        %v1302 = vsub.f32 %v1096, %v1224
        %v1303 = vsub.f32 %v1098, %v1224
        %v1304 = vsub.f32 %v1100, %v1227
        %v1305 = vsub.f32 %v1102, %v1227
        %v1306 = vsub.f32 %v1106, %v1230
        %v1307 = vsub.f32 %v1108, %v1230
        %v1308 = vsub.f32 %v1110, %v1233
        %v1309 = vsub.f32 %v1112, %v1233
        %v1310 = vsub.f32 %v1116, %v1236
        %v1311 = vsub.f32 %v1118, %v1236
        %v1312 = vsub.f32 %v1120, %v1239
        %v1313 = vsub.f32 %v1122, %v1239
        %v1314 = vsub.f32 %v1126, %v1242
        %v1315 = vsub.f32 %v1128, %v1242
        %v1316 = vsub.f32 %v1130, %v1245
        %v1317 = vsub.f32 %v1132, %v1245
        %v1318 = vsub.f32 %v1136, %v1248
        %v1319 = vsub.f32 %v1138, %v1248
        %v1320 = vsub.f32 %v1140, %v1251
        %v1321 = vsub.f32 %v1142, %v1251
        %v1322 = vsub.f32 %v1146, %v1254
        %v1323 = vsub.f32 %v1148, %v1254
        %v1324 = vsub.f32 %v1150, %v1257
        %v1325 = vsub.f32 %v1152, %v1257
        %v1326 = vsub.f32 %v1156, %v1260
        %v1327 = vsub.f32 %v1158, %v1260
        %v1328 = vsub.f32 %v1160, %v1263
        %v1329 = vsub.f32 %v1162, %v1263
        %v1330 = vsub.f32 %v1166, %v1266
        %v1331 = vsub.f32 %v1168, %v1266
        %v1332 = vsub.f32 %v1170, %v1269
        %v1333 = vsub.f32 %v1172, %v1269
        %v1334 = vmul.f32 %v1270, 1.442695
        %v1335 = vpow.pop %v1334
        %v1336 = vmul.f32 %v1271, 1.442695
        %v1337 = vpow.pop %v1336
        %v1338 = vmul.f32 %v1272, 1.442695
        %v1339 = vpow.pop %v1338
        %v1340 = vmul.f32 %v1273, 1.442695
        %v1341 = vpow.pop %v1340
        %v1342 = vmul.f32 %v1274, 1.442695
        %v1343 = vpow.pop %v1342
        %v1344 = vmul.f32 %v1275, 1.442695
        %v1345 = vpow.pop %v1344
        %v1346 = vmul.f32 %v1276, 1.442695
        %v1347 = vpow.pop %v1346
        %v1348 = vmul.f32 %v1277, 1.442695
        %v1349 = vpow.pop %v1348
        %v1350 = vmul.f32 %v1278, 1.442695
        %v1351 = vpow.pop %v1350
        %v1352 = vmul.f32 %v1279, 1.442695
        %v1353 = vpow.pop %v1352
        %v1354 = vmul.f32 %v1280, 1.442695
        %v1355 = vpow.pop %v1354
        %v1356 = vmul.f32 %v1281, 1.442695
        %v1357 = vpow.pop %v1356
        %v1358 = vmul.f32 %v1282, 1.442695
        %v1359 = vpow.pop %v1358
        %v1360 = vmul.f32 %v1283, 1.442695
        %v1361 = vpow.pop %v1360
        %v1362 = vmul.f32 %v1284, 1.442695
        %v1363 = vpow.pop %v1362
        %v1364 = vmul.f32 %v1285, 1.442695
        %v1365 = vpow.pop %v1364
        %v1366 = vmul.f32 %v1286, 1.442695
        %v1367 = vpow.pop %v1366
        %v1368 = vmul.f32 %v1287, 1.442695
        %v1369 = vpow.pop %v1368
        %v1370 = vmul.f32 %v1288, 1.442695
        %v1371 = vpow.pop %v1370
        %v1372 = vmul.f32 %v1289, 1.442695
        %v1373 = vpow.pop %v1372
        %v1374 = vmul.f32 %v1290, 1.442695
        %v1375 = vpow.pop %v1374
        %v1376 = vmul.f32 %v1291, 1.442695
        %v1377 = vpow.pop %v1376
        %v1378 = vmul.f32 %v1292, 1.442695
        %v1379 = vpow.pop %v1378
        %v1380 = vmul.f32 %v1293, 1.442695
        %v1381 = vpow.pop %v1380
        %v1382 = vmul.f32 %v1294, 1.442695
        %v1383 = vpow.pop %v1382
        %v1384 = vmul.f32 %v1295, 1.442695
        %v1385 = vpow.pop %v1384
        %v1386 = vmul.f32 %v1296, 1.442695
        %v1387 = vpow.pop %v1386
        %v1388 = vmul.f32 %v1297, 1.442695
        %v1389 = vpow.pop %v1388
        %v1390 = vmul.f32 %v1298, 1.442695
        %v1391 = vpow.pop %v1390
        %v1392 = vmul.f32 %v1299, 1.442695
        %v1393 = vpow.pop %v1392
        %v1394 = vmul.f32 %v1300, 1.442695
        %v1395 = vpow.pop %v1394
        %v1396 = vmul.f32 %v1301, 1.442695
        %v1397 = vpow.pop %v1396
        %v1398 = vmul.f32 %v1302, 1.442695
        %v1399 = vpow.pop %v1398
        %v1400 = vmul.f32 %v1303, 1.442695
        %v1401 = vpow.pop %v1400
        %v1402 = vmul.f32 %v1304, 1.442695
        %v1403 = vpow.pop %v1402
        %v1404 = vmul.f32 %v1305, 1.442695
        %v1405 = vpow.pop %v1404
        %v1406 = vmul.f32 %v1306, 1.442695
        %v1407 = vpow.pop %v1406
        %v1408 = vmul.f32 %v1307, 1.442695
        %v1409 = vpow.pop %v1408
        %v1410 = vmul.f32 %v1308, 1.442695
        %v1411 = vpow.pop %v1410
        %v1412 = vmul.f32 %v1309, 1.442695
        %v1413 = vpow.pop %v1412
        %v1414 = vmul.f32 %v1310, 1.442695
        %v1415 = vpow.pop %v1414
        %v1416 = vmul.f32 %v1311, 1.442695
        %v1417 = vpow.pop %v1416
        %v1418 = vmul.f32 %v1312, 1.442695
        %v1419 = vpow.pop %v1418
        %v1420 = vmul.f32 %v1313, 1.442695
        %v1421 = vpow.pop %v1420
        %v1422 = vmul.f32 %v1314, 1.442695
        %v1423 = vpow.pop %v1422
        %v1424 = vmul.f32 %v1315, 1.442695
        %v1425 = vpow.pop %v1424
        %v1426 = vmul.f32 %v1316, 1.442695
        %v1427 = vpow.pop %v1426
        %v1428 = vmul.f32 %v1317, 1.442695
        %v1429 = vpow.pop %v1428
        %v1430 = vmul.f32 %v1318, 1.442695
        %v1431 = vpow.pop %v1430
        %v1432 = vmul.f32 %v1319, 1.442695
        %v1433 = vpow.pop %v1432
        %v1434 = vmul.f32 %v1320, 1.442695
        %v1435 = vpow.pop %v1434
        %v1436 = vmul.f32 %v1321, 1.442695
        %v1437 = vpow.pop %v1436
        %v1438 = vmul.f32 %v1322, 1.442695
        %v1439 = vpow.pop %v1438
        %v1440 = vmul.f32 %v1323, 1.442695
        %v1441 = vpow.pop %v1440
        %v1442 = vmul.f32 %v1324, 1.442695
        %v1443 = vpow.pop %v1442
        %v1444 = vmul.f32 %v1325, 1.442695
        %v1445 = vpow.pop %v1444
        %v1446 = vmul.f32 %v1326, 1.442695
        %v1447 = vpow.pop %v1446
        %v1448 = vmul.f32 %v1327, 1.442695
        %v1449 = vpow.pop %v1448
        %v1450 = vmul.f32 %v1328, 1.442695
        %v1451 = vpow.pop %v1450
        %v1452 = vmul.f32 %v1329, 1.442695
        %v1453 = vpow.pop %v1452
        %v1454 = vmul.f32 %v1330, 1.442695
        %v1455 = vpow.pop %v1454
        %v1456 = vmul.f32 %v1331, 1.442695
        %v1457 = vpow.pop %v1456
        %v1458 = vmul.f32 %v1332, 1.442695
        %v1459 = vpow.pop %v1458
        %v1460 = vmul.f32 %v1333, 1.442695
        %v1461 = vpow.pop %v1460
        %v1462 = vadd.f32 %v1335, %v1337
        %1463 = vadd.xlane.f32.xlu0 %v1462
        %v1464 = vpop.xlane.xlu0 %1463
        %v1465 = vadd.f32 %v1339, %v1341
        %1466 = vadd.xlane.f32.xlu0 %v1465
        %v1467 = vpop.xlane.xlu0 %1466
        %v1468 = vadd.f32 %v1343, %v1345
        %1469 = vadd.xlane.f32.xlu0 %v1468
        %v1470 = vpop.xlane.xlu0 %1469
        %v1471 = vadd.f32 %v1347, %v1349
        %1472 = vadd.xlane.f32.xlu0 %v1471
        %v1473 = vpop.xlane.xlu0 %1472
        %v1474 = vadd.f32 %v1351, %v1353
        %1475 = vadd.xlane.f32.xlu0 %v1474
        %v1476 = vpop.xlane.xlu0 %1475
        %v1477 = vadd.f32 %v1355, %v1357
        %1478 = vadd.xlane.f32.xlu0 %v1477
        %v1479 = vpop.xlane.xlu0 %1478
        %v1480 = vadd.f32 %v1359, %v1361
        %1481 = vadd.xlane.f32.xlu0 %v1480
        %v1482 = vpop.xlane.xlu0 %1481
        %v1483 = vadd.f32 %v1363, %v1365
        %1484 = vadd.xlane.f32.xlu0 %v1483
        %v1485 = vpop.xlane.xlu0 %1484
        %v1486 = vadd.f32 %v1367, %v1369
        %1487 = vadd.xlane.f32.xlu0 %v1486
        %v1488 = vpop.xlane.xlu0 %1487
        %v1489 = vadd.f32 %v1371, %v1373
        %1490 = vadd.xlane.f32.xlu0 %v1489
        %v1491 = vpop.xlane.xlu0 %1490
        %v1492 = vadd.f32 %v1375, %v1377
        %1493 = vadd.xlane.f32.xlu0 %v1492
        %v1494 = vpop.xlane.xlu0 %1493
        %v1495 = vadd.f32 %v1379, %v1381
        %1496 = vadd.xlane.f32.xlu0 %v1495
        %v1497 = vpop.xlane.xlu0 %1496
        %v1498 = vadd.f32 %v1383, %v1385
        %1499 = vadd.xlane.f32.xlu0 %v1498
        %v1500 = vpop.xlane.xlu0 %1499
        %v1501 = vadd.f32 %v1387, %v1389
        %1502 = vadd.xlane.f32.xlu0 %v1501
        %v1503 = vpop.xlane.xlu0 %1502
        %v1504 = vadd.f32 %v1391, %v1393
        %1505 = vadd.xlane.f32.xlu0 %v1504
        %v1506 = vpop.xlane.xlu0 %1505
        %v1507 = vadd.f32 %v1395, %v1397
        %1508 = vadd.xlane.f32.xlu0 %v1507
        %v1509 = vpop.xlane.xlu0 %1508
        %v1510 = vadd.f32 %v1399, %v1401
        %1511 = vadd.xlane.f32.xlu0 %v1510
        %v1512 = vpop.xlane.xlu0 %1511
        %v1513 = vadd.f32 %v1403, %v1405
        %1514 = vadd.xlane.f32.xlu0 %v1513
        %v1515 = vpop.xlane.xlu0 %1514
        %v1516 = vadd.f32 %v1407, %v1409
        %1517 = vadd.xlane.f32.xlu0 %v1516
        %v1518 = vpop.xlane.xlu0 %1517
        %v1519 = vadd.f32 %v1411, %v1413
        %1520 = vadd.xlane.f32.xlu0 %v1519
        %v1521 = vpop.xlane.xlu0 %1520
        %v1522 = vadd.f32 %v1415, %v1417
        %1523 = vadd.xlane.f32.xlu0 %v1522
        %v1524 = vpop.xlane.xlu0 %1523
        %v1525 = vadd.f32 %v1419, %v1421
        %1526 = vadd.xlane.f32.xlu0 %v1525
        %v1527 = vpop.xlane.xlu0 %1526
        %v1528 = vadd.f32 %v1423, %v1425
        %1529 = vadd.xlane.f32.xlu0 %v1528
        %v1530 = vpop.xlane.xlu0 %1529
        %v1531 = vadd.f32 %v1427, %v1429
        %1532 = vadd.xlane.f32.xlu0 %v1531
        %v1533 = vpop.xlane.xlu0 %1532
        %v1534 = vadd.f32 %v1431, %v1433
        %1535 = vadd.xlane.f32.xlu0 %v1534
        %v1536 = vpop.xlane.xlu0 %1535
        %v1537 = vadd.f32 %v1435, %v1437
        %1538 = vadd.xlane.f32.xlu0 %v1537
        %v1539 = vpop.xlane.xlu0 %1538
        %v1540 = vadd.f32 %v1439, %v1441
        %1541 = vadd.xlane.f32.xlu0 %v1540
        %v1542 = vpop.xlane.xlu0 %1541
        %v1543 = vadd.f32 %v1443, %v1445
        %1544 = vadd.xlane.f32.xlu0 %v1543
        %v1545 = vpop.xlane.xlu0 %1544
        %v1546 = vadd.f32 %v1447, %v1449
        %1547 = vadd.xlane.f32.xlu0 %v1546
        %v1548 = vpop.xlane.xlu0 %1547
        %v1549 = vadd.f32 %v1451, %v1453
        %1550 = vadd.xlane.f32.xlu0 %v1549
        %v1551 = vpop.xlane.xlu0 %1550
        %v1552 = vadd.f32 %v1455, %v1457
        %1553 = vadd.xlane.f32.xlu0 %v1552
        %v1554 = vpop.xlane.xlu0 %1553
        %v1555 = vadd.f32 %v1459, %v1461
        %1556 = vadd.xlane.f32.xlu0 %v1555
        %v1557 = vpop.xlane.xlu0 %1556
        %v1558 = vpack.c.bf16 %v1339, %v1335
        %v1559 = vpack.c.bf16 %v1341, %v1337
        %v1560 = vpack.c.bf16 %v1347, %v1343
        %v1561 = vpack.c.bf16 %v1349, %v1345
        %v1562 = vpack.c.bf16 %v1355, %v1351
        %v1563 = vpack.c.bf16 %v1357, %v1353
        %v1564 = vpack.c.bf16 %v1363, %v1359
        %v1565 = vpack.c.bf16 %v1365, %v1361
        %v1566 = vpack.c.bf16 %v1371, %v1367
        %v1567 = vpack.c.bf16 %v1373, %v1369
        %v1568 = vpack.c.bf16 %v1379, %v1375
        %v1569 = vpack.c.bf16 %v1381, %v1377
        %v1570 = vpack.c.bf16 %v1387, %v1383
        %v1571 = vpack.c.bf16 %v1389, %v1385
        %v1572 = vpack.c.bf16 %v1395, %v1391
        %v1573 = vpack.c.bf16 %v1397, %v1393
        %v1574 = vpack.c.bf16 %v1403, %v1399
        %v1575 = vpack.c.bf16 %v1405, %v1401
        %v1576 = vpack.c.bf16 %v1411, %v1407
        %v1577 = vpack.c.bf16 %v1413, %v1409
        %v1578 = vpack.c.bf16 %v1419, %v1415
        %v1579 = vpack.c.bf16 %v1421, %v1417
        %v1580 = vpack.c.bf16 %v1427, %v1423
        %v1581 = vpack.c.bf16 %v1429, %v1425
        %v1582 = vpack.c.bf16 %v1435, %v1431
        %v1583 = vpack.c.bf16 %v1437, %v1433
        %v1584 = vpack.c.bf16 %v1443, %v1439
        %v1585 = vpack.c.bf16 %v1445, %v1441
        %v1586 = vpack.c.bf16 %v1451, %v1447
        %v1587 = vpack.c.bf16 %v1453, %v1449
        %v1588 = vpack.c.bf16 %v1459, %v1455
        %v1589 = vpack.c.bf16 %v1461, %v1457
        %1590 = vmatprep.subr.bf16.mxu0 %v1559
        %1591 = vmatpush1.bf16.xpose.msra.mxu0 %v1558
        %1592 = vmatprep.subr.bf16.mxu0 %v1561
        %1593 = vmatpush1.bf16.xpose.msra.mxu0 %v1560
        %1594 = vmatprep.subr.bf16.mxu0 %v1563
        %1595 = vmatpush1.bf16.xpose.msra.mxu0 %v1562
        %1596 = vmatprep.subr.bf16.mxu0 %v1565
        %1597 = vmatpush1.bf16.xpose.msra.mxu0 %v1564
        %1598 = vmatprep.subr.bf16.mxu0 %v1567
        %1599 = vmatpush1.bf16.xpose.msra.mxu0 %v1566
        %1600 = vmatprep.subr.bf16.mxu0 %v1569
        %1601 = vmatpush1.bf16.xpose.msra.mxu0 %v1568
        %1602 = vmatprep.subr.bf16.mxu0 %v1571
        %1603 = vmatpush1.bf16.xpose.msra.mxu0 %v1570
        %1604 = vmatprep.subr.bf16.mxu0 %v1573
        %1605 = vmatpush1.bf16.xpose.msra.mxu0 %v1572
        %1606 = vmatprep.subr.bf16.mxu0 %v1575
        %1607 = vmatpush1.bf16.xpose.msra.mxu0 %v1574
        %1608 = vmatprep.subr.bf16.mxu0 %v1577
        %1609 = vmatpush1.bf16.xpose.msra.mxu0 %v1576
        %1610 = vmatprep.subr.bf16.mxu0 %v1579
        %1611 = vmatpush1.bf16.xpose.msra.mxu0 %v1578
        %1612 = vmatprep.subr.bf16.mxu0 %v1581
        %1613 = vmatpush1.bf16.xpose.msra.mxu0 %v1580
        %1614 = vmatprep.subr.bf16.mxu0 %v1583
        %1615 = vmatpush1.bf16.xpose.msra.mxu0 %v1582
        %1616 = vmatprep.subr.bf16.mxu0 %v1585
        %1617 = vmatpush1.bf16.xpose.msra.mxu0 %v1584
        %1618 = vmatprep.subr.bf16.mxu0 %v1587
        %1619 = vmatpush1.bf16.xpose.msra.mxu0 %v1586
        %1620 = vmatprep.subr.bf16.mxu0 %v1589
        %1621 = vmatpush1.bf16.xpose.msra.mxu0 %v1588
        %1622 = vmatprep.mubr.bf16.mxu0 %v895
        %1623 = vmatmul.mubr.bf16.gmra.mrb[0].mxu0 %v894
        %v1624 = vpop.f32.mrb[0].mxu0
        %v1625 = vadd.f32 0.0, %v1624
        %v1626 = vpop.f32.mrb[0].mxu0
        %v1627 = vadd.f32 0.0, %v1626
        %v1628 = vpop.f32.mrb[0].mxu0
        %v1629 = vadd.f32 0.0, %v1628
        %v1630 = vpop.f32.mrb[0].mxu0
        %v1631 = vadd.f32 0.0, %v1630
        %1632 = vdwg.mxu0
        %v1633 = vrcp.pop %v1464
        %v1634 = vrcp.pop %v1467
        %v1635 = vrcp.pop %v1470
        %v1636 = vrcp.pop %v1473
        %v1637 = vrcp.pop %v1476
        %v1638 = vrcp.pop %v1479
        %v1639 = vrcp.pop %v1482
        %v1640 = vrcp.pop %v1485
        %v1641 = vrcp.pop %v1488
        %v1642 = vrcp.pop %v1491
        %v1643 = vrcp.pop %v1494
        %v1644 = vrcp.pop %v1497
        %v1645 = vrcp.pop %v1500
        %v1646 = vrcp.pop %v1503
        %v1647 = vrcp.pop %v1506
        %v1648 = vrcp.pop %v1509
        %v1649 = vrcp.pop %v1512
        %v1650 = vrcp.pop %v1515
        %v1651 = vrcp.pop %v1518
        %v1652 = vrcp.pop %v1521
        %v1653 = vrcp.pop %v1524
        %v1654 = vrcp.pop %v1527
        %v1655 = vrcp.pop %v1530
        %v1656 = vrcp.pop %v1533
        %v1657 = vrcp.pop %v1536
        %v1658 = vrcp.pop %v1539
        %v1659 = vrcp.pop %v1542
        %v1660 = vrcp.pop %v1545
        %v1661 = vrcp.pop %v1548
        %v1662 = vrcp.pop %v1551
        %v1663 = vrcp.pop %v1554
        %v1664 = vrcp.pop %v1557
        %1665 = vxpose.xlu0.b32.start [1/16] %v1633, 128
        %1666 = vxpose.xlu0.b32.cont [2/16] %v1634, 128
        %1667 = vxpose.xlu0.b32.cont [3/16] %v1635, 128
        %1668 = vxpose.xlu0.b32.cont [4/16] %v1636, 128
        %1669 = vxpose.xlu0.b32.cont [5/16] %v1637, 128
        %1670 = vxpose.xlu0.b32.cont [6/16] %v1638, 128
        %1671 = vxpose.xlu0.b32.cont [7/16] %v1639, 128
        %1672 = vxpose.xlu0.b32.cont [8/16] %v1640, 128
        %1673 = vxpose.xlu0.b32.cont [9/16] %v1641, 128
        %1674 = vxpose.xlu0.b32.cont [10/16] %v1642, 128
        %1675 = vxpose.xlu0.b32.cont [11/16] %v1643, 128
        %1676 = vxpose.xlu0.b32.cont [12/16] %v1644, 128
        %1677 = vxpose.xlu0.b32.cont [13/16] %v1645, 128
        %1678 = vxpose.xlu0.b32.cont [14/16] %v1646, 128
        %1679 = vxpose.xlu0.b32.cont [15/16] %v1647, 128
        %1680 = vxpose.xlu0.b32.end [16/16] %v1648, 128
        %v1681 = vpop.trf.xlu0
        %v1682 = vpop.trf.xlu0
        %v1683 = vpop.trf.xlu0
        %v1684 = vpop.trf.xlu0
        %v1685 = vpop.trf.xlu0
        %v1686 = vpop.trf.xlu0
        %v1687 = vpop.trf.xlu0
        %v1688 = vpop.trf.xlu0
        %v1689 = vpop.trf.xlu0
        %v1690 = vpop.trf.xlu0
        %v1691 = vpop.trf.xlu0
        %v1692 = vpop.trf.xlu0
        %v1693 = vpop.trf.xlu0
        %v1694 = vpop.trf.xlu0
        %v1695 = vpop.trf.xlu0
        %v1696 = vpop.trf.xlu0
        %1697 = vxpose.xlu0.b32.start [1/16] %v1649, 128
        %1698 = vxpose.xlu0.b32.cont [2/16] %v1650, 128
        %1699 = vxpose.xlu0.b32.cont [3/16] %v1651, 128
        %1700 = vxpose.xlu0.b32.cont [4/16] %v1652, 128
        %1701 = vxpose.xlu0.b32.cont [5/16] %v1653, 128
        %1702 = vxpose.xlu0.b32.cont [6/16] %v1654, 128
        %1703 = vxpose.xlu0.b32.cont [7/16] %v1655, 128
        %1704 = vxpose.xlu0.b32.cont [8/16] %v1656, 128
        %1705 = vxpose.xlu0.b32.cont [9/16] %v1657, 128
        %1706 = vxpose.xlu0.b32.cont [10/16] %v1658, 128
        %1707 = vxpose.xlu0.b32.cont [11/16] %v1659, 128
        %1708 = vxpose.xlu0.b32.cont [12/16] %v1660, 128
        %1709 = vxpose.xlu0.b32.cont [13/16] %v1661, 128
        %1710 = vxpose.xlu0.b32.cont [14/16] %v1662, 128
        %1711 = vxpose.xlu0.b32.cont [15/16] %v1663, 128
        %1712 = vxpose.xlu0.b32.end [16/16] %v1664, 128
        %v1713 = vpop.trf.xlu0
        %v1714 = vpop.trf.xlu0
        %v1715 = vpop.trf.xlu0
        %v1716 = vpop.trf.xlu0
        %v1717 = vpop.trf.xlu0
        %v1718 = vpop.trf.xlu0
        %v1719 = vpop.trf.xlu0
        %v1720 = vpop.trf.xlu0
        %v1721 = vpop.trf.xlu0
        %v1722 = vpop.trf.xlu0
        %v1723 = vpop.trf.xlu0
        %v1724 = vpop.trf.xlu0
        %v1725 = vpop.trf.xlu0
        %v1726 = vpop.trf.xlu0
        %v1727 = vpop.trf.xlu0
        %v1728 = vpop.trf.xlu0
        %v1729 = vlaneseq
        %v1730 = vshrl.u32 %v1729, 7
        %v1731 = vsub.s32 0, %v1730
        %v1732 = vrot.slane %v1681, %v1731
        %v1733 = vlaneseq
        %v1734 = vshrl.u32 %v1733, 7
        %v1735 = vsub.s32 0, %v1734
        %v1736 = vrot.slane %v1713, %v1735
        %v1737 = vmul.f32 %v1625, %v1732
        %v1738 = vmul.f32 %v1627, %v1736
        %v1739 = vmul.f32 %v1629, %v1732
        %v1740 = vmul.f32 %v1631, %v1736
        %v1741 = vpack.c.bf16 %v1739, %v1737
        %v1742 = vpack.c.bf16 %v1740, %v1738
        %1743 = vst [vmem:[#allocation3] sm:$0xff] %v1741
        %1744 = vst [vmem:[#allocation3 + $0x8] sm:$0xff] %v1742
        %v1745 = vld [vmem:[#allocation2 + $0x10] sm:$0xff]
        %v1746 = vld [vmem:[#allocation2 + $0x18] sm:$0xff]
        %1747 = vxpose.xlu0.c.b16.start [1/8] %v1745, 128
        %1748 = vxpose.xlu0.c.b16.cont [2/8] 0, 128
        %1749 = vxpose.xlu0.c.b16.cont [3/8] 0, 128
        %1750 = vxpose.xlu0.c.b16.cont [4/8] 0, 128
        %1751 = vxpose.xlu0.c.b16.cont [5/8] 0, 128
        %1752 = vxpose.xlu0.c.b16.cont [6/8] 0, 128
        %1753 = vxpose.xlu0.c.b16.cont [7/8] 0, 128
        %1754 = vxpose.xlu0.c.b16.end [8/8] 0, 128
        %v1755 = vpop.trf.xlu0
        %v1756 = vpop.trf.xlu0
        %v1757 = vpop.trf.xlu0
        %v1758 = vpop.trf.xlu0
        %v1759 = vpop.trf.xlu0
        %v1760 = vpop.trf.xlu0
        %v1761 = vpop.trf.xlu0
        %v1762 = vpop.trf.xlu0
        %1763 = vxpose.xlu0.c.b16.start [1/8] %v1746, 128
        %1764 = vxpose.xlu0.c.b16.cont [2/8] 0, 128
        %1765 = vxpose.xlu0.c.b16.cont [3/8] 0, 128
        %1766 = vxpose.xlu0.c.b16.cont [4/8] 0, 128
        %1767 = vxpose.xlu0.c.b16.cont [5/8] 0, 128
        %1768 = vxpose.xlu0.c.b16.cont [6/8] 0, 128
        %1769 = vxpose.xlu0.c.b16.cont [7/8] 0, 128
        %1770 = vxpose.xlu0.c.b16.end [8/8] 0, 128
        %v1771 = vpop.trf.xlu0
        %v1772 = vpop.trf.xlu0
        %v1773 = vpop.trf.xlu0
        %v1774 = vpop.trf.xlu0
        %v1775 = vpop.trf.xlu0
        %v1776 = vpop.trf.xlu0
        %v1777 = vpop.trf.xlu0
        %v1778 = vpop.trf.xlu0
        %v1780 = vsel %vm932, %v1755, 0
        %v1783 = vsel %vm932, %v1756, 0
        %v1786 = vsel %vm932, %v1757, 0
        %v1789 = vsel %vm932, %v1758, 0
        %v1792 = vsel %vm932, %v1759, 0
        %v1795 = vsel %vm932, %v1760, 0
        %v1798 = vsel %vm932, %v1761, 0
        %v1801 = vsel %vm932, %v1762, 0
        %v1804 = vsel %vm932, %v1771, 0
        %v1807 = vsel %vm932, %v1772, 0
        %v1810 = vsel %vm932, %v1773, 0
        %v1813 = vsel %vm932, %v1774, 0
        %v1816 = vsel %vm932, %v1775, 0
        %v1819 = vsel %vm932, %v1776, 0
        %v1822 = vsel %vm932, %v1777, 0
        %v1825 = vsel %vm932, %v1778, 0
        %1827 = vmatprep.subr.bf16.mxu0 %v820
        %1828 = vmatpush1.bf16.msra.mxu0 %v819
        %1829 = vmatprep.subr.bf16.mxu0 0
        %1830 = vmatpush1.bf16.msra.mxu0 0
        %1831 = vmatprep.subr.bf16.mxu0 0
        %1832 = vmatpush1.bf16.msra.mxu0 0
        %1833 = vmatprep.subr.bf16.mxu0 0
        %1834 = vmatpush1.bf16.msra.mxu0 0
        %1835 = vmatprep.subr.bf16.mxu0 0
        %1836 = vmatpush1.bf16.msra.mxu0 0
        %1837 = vmatprep.subr.bf16.mxu0 0
        %1838 = vmatpush1.bf16.msra.mxu0 0
        %1839 = vmatprep.subr.bf16.mxu0 0
        %1840 = vmatpush1.bf16.msra.mxu0 0
        %1841 = vmatprep.subr.bf16.mxu0 0
        %1842 = vmatpush1.bf16.msra.mxu0 0
        %1843 = vmatprep.subr.bf16.mxu0 0
        %1844 = vmatpush1.bf16.msra.mxu0 0
        %1845 = vmatprep.subr.bf16.mxu0 0
        %1846 = vmatpush1.bf16.msra.mxu0 0
        %1847 = vmatprep.subr.bf16.mxu0 0
        %1848 = vmatpush1.bf16.msra.mxu0 0
        %1849 = vmatprep.subr.bf16.mxu0 0
        %1850 = vmatpush1.bf16.msra.mxu0 0
        %1851 = vmatprep.subr.bf16.mxu0 0
        %1852 = vmatpush1.bf16.msra.mxu0 0
        %1853 = vmatprep.subr.bf16.mxu0 0
        %1854 = vmatpush1.bf16.msra.mxu0 0
        %1855 = vmatprep.subr.bf16.mxu0 0
        %1856 = vmatpush1.bf16.msra.mxu0 0
        %1857 = vmatprep.subr.bf16.mxu0 0
        %1858 = vmatpush1.bf16.msra.mxu0 0
        %1859 = vmatprep.mubr.bf16.mxu0 0
        %1860 = vmatmul.mubr.bf16.gmra.mrb[0].mxu0 %v1780
        %v1861 = vpop.f32.mrb[0].mxu0
        %v1862 = vadd.f32 0.0, %v1861
        %v1863 = vpop.f32.mrb[0].mxu0
        %v1864 = vadd.f32 0.0, %v1863
        %v1865 = vpop.f32.mrb[0].mxu0
        %v1866 = vadd.f32 0.0, %v1865
        %v1867 = vpop.f32.mrb[0].mxu0
        %v1868 = vadd.f32 0.0, %v1867
        %1869 = vmatprep.mubr.bf16.mxu0 0
        %1870 = vmatmul.mubr.bf16.gmra.mrb[0].mxu0 %v1783
        %v1871 = vpop.f32.mrb[0].mxu0
        %v1872 = vadd.f32 0.0, %v1871
        %v1873 = vpop.f32.mrb[0].mxu0
        %v1874 = vadd.f32 0.0, %v1873
        %v1875 = vpop.f32.mrb[0].mxu0
        %v1876 = vadd.f32 0.0, %v1875
        %v1877 = vpop.f32.mrb[0].mxu0
        %v1878 = vadd.f32 0.0, %v1877
        %1879 = vmatprep.mubr.bf16.mxu0 0
        %1880 = vmatmul.mubr.bf16.gmra.mrb[0].mxu0 %v1786
        %v1881 = vpop.f32.mrb[0].mxu0
        %v1882 = vadd.f32 0.0, %v1881
        %v1883 = vpop.f32.mrb[0].mxu0
        %v1884 = vadd.f32 0.0, %v1883
        %v1885 = vpop.f32.mrb[0].mxu0
        %v1886 = vadd.f32 0.0, %v1885
        %v1887 = vpop.f32.mrb[0].mxu0
        %v1888 = vadd.f32 0.0, %v1887
        %1889 = vmatprep.mubr.bf16.mxu0 0
        %1890 = vmatmul.mubr.bf16.gmra.mrb[0].mxu0 %v1789
        %v1891 = vpop.f32.mrb[0].mxu0
        %v1892 = vadd.f32 0.0, %v1891
        %v1893 = vpop.f32.mrb[0].mxu0
        %v1894 = vadd.f32 0.0, %v1893
        %v1895 = vpop.f32.mrb[0].mxu0
        %v1896 = vadd.f32 0.0, %v1895
        %v1897 = vpop.f32.mrb[0].mxu0
        %v1898 = vadd.f32 0.0, %v1897
        %1899 = vmatprep.mubr.bf16.mxu0 0
        %1900 = vmatmul.mubr.bf16.gmra.mrb[0].mxu0 %v1792
        %v1901 = vpop.f32.mrb[0].mxu0
        %v1902 = vadd.f32 0.0, %v1901
        %v1903 = vpop.f32.mrb[0].mxu0
        %v1904 = vadd.f32 0.0, %v1903
        %v1905 = vpop.f32.mrb[0].mxu0
        %v1906 = vadd.f32 0.0, %v1905
        %v1907 = vpop.f32.mrb[0].mxu0
        %v1908 = vadd.f32 0.0, %v1907
        %1909 = vmatprep.mubr.bf16.mxu0 0
        %1910 = vmatmul.mubr.bf16.gmra.mrb[0].mxu0 %v1795
        %v1911 = vpop.f32.mrb[0].mxu0
        %v1912 = vadd.f32 0.0, %v1911
        %v1913 = vpop.f32.mrb[0].mxu0
        %v1914 = vadd.f32 0.0, %v1913
        %v1915 = vpop.f32.mrb[0].mxu0
        %v1916 = vadd.f32 0.0, %v1915
        %v1917 = vpop.f32.mrb[0].mxu0
        %v1918 = vadd.f32 0.0, %v1917
        %1919 = vmatprep.mubr.bf16.mxu0 0
        %1920 = vmatmul.mubr.bf16.gmra.mrb[0].mxu0 %v1798
        %v1921 = vpop.f32.mrb[0].mxu0
        %v1922 = vadd.f32 0.0, %v1921
        %v1923 = vpop.f32.mrb[0].mxu0
        %v1924 = vadd.f32 0.0, %v1923
        %v1925 = vpop.f32.mrb[0].mxu0
        %v1926 = vadd.f32 0.0, %v1925
        %v1927 = vpop.f32.mrb[0].mxu0
        %v1928 = vadd.f32 0.0, %v1927
        %1929 = vmatprep.mubr.bf16.mxu0 0
        %1930 = vmatmul.mubr.bf16.gmra.mrb[0].mxu0 %v1801
        %v1931 = vpop.f32.mrb[0].mxu0
        %v1932 = vadd.f32 0.0, %v1931
        %v1933 = vpop.f32.mrb[0].mxu0
        %v1934 = vadd.f32 0.0, %v1933
        %v1935 = vpop.f32.mrb[0].mxu0
        %v1936 = vadd.f32 0.0, %v1935
        %v1937 = vpop.f32.mrb[0].mxu0
        %v1938 = vadd.f32 0.0, %v1937
        %1939 = vmatprep.mubr.bf16.mxu0 0
        %1940 = vmatmul.mubr.bf16.gmra.mrb[0].mxu0 %v1804
        %v1941 = vpop.f32.mrb[0].mxu0
        %v1942 = vadd.f32 0.0, %v1941
        %v1943 = vpop.f32.mrb[0].mxu0
        %v1944 = vadd.f32 0.0, %v1943
        %v1945 = vpop.f32.mrb[0].mxu0
        %v1946 = vadd.f32 0.0, %v1945
        %v1947 = vpop.f32.mrb[0].mxu0
        %v1948 = vadd.f32 0.0, %v1947
        %1949 = vmatprep.mubr.bf16.mxu0 0
        %1950 = vmatmul.mubr.bf16.gmra.mrb[0].mxu0 %v1807
        %v1951 = vpop.f32.mrb[0].mxu0
        %v1952 = vadd.f32 0.0, %v1951
        %v1953 = vpop.f32.mrb[0].mxu0
        %v1954 = vadd.f32 0.0, %v1953
        %v1955 = vpop.f32.mrb[0].mxu0
        %v1956 = vadd.f32 0.0, %v1955
        %v1957 = vpop.f32.mrb[0].mxu0
        %v1958 = vadd.f32 0.0, %v1957
        %1959 = vmatprep.mubr.bf16.mxu0 0
        %1960 = vmatmul.mubr.bf16.gmra.mrb[0].mxu0 %v1810
        %v1961 = vpop.f32.mrb[0].mxu0
        %v1962 = vadd.f32 0.0, %v1961
        %v1963 = vpop.f32.mrb[0].mxu0
        %v1964 = vadd.f32 0.0, %v1963
        %v1965 = vpop.f32.mrb[0].mxu0
        %v1966 = vadd.f32 0.0, %v1965
        %v1967 = vpop.f32.mrb[0].mxu0
        %v1968 = vadd.f32 0.0, %v1967
        %1969 = vmatprep.mubr.bf16.mxu0 0
        %1970 = vmatmul.mubr.bf16.gmra.mrb[0].mxu0 %v1813
        %v1971 = vpop.f32.mrb[0].mxu0
        %v1972 = vadd.f32 0.0, %v1971
        %v1973 = vpop.f32.mrb[0].mxu0
        %v1974 = vadd.f32 0.0, %v1973
        %v1975 = vpop.f32.mrb[0].mxu0
        %v1976 = vadd.f32 0.0, %v1975
        %v1977 = vpop.f32.mrb[0].mxu0
        %v1978 = vadd.f32 0.0, %v1977
        %1979 = vmatprep.mubr.bf16.mxu0 0
        %1980 = vmatmul.mubr.bf16.gmra.mrb[0].mxu0 %v1816
        %v1981 = vpop.f32.mrb[0].mxu0
        %v1982 = vadd.f32 0.0, %v1981
        %v1983 = vpop.f32.mrb[0].mxu0
        %v1984 = vadd.f32 0.0, %v1983
        %v1985 = vpop.f32.mrb[0].mxu0
        %v1986 = vadd.f32 0.0, %v1985
        %v1987 = vpop.f32.mrb[0].mxu0
        %v1988 = vadd.f32 0.0, %v1987
        %1989 = vmatprep.mubr.bf16.mxu0 0
        %1990 = vmatmul.mubr.bf16.gmra.mrb[0].mxu0 %v1819
        %v1991 = vpop.f32.mrb[0].mxu0
        %v1992 = vadd.f32 0.0, %v1991
        %v1993 = vpop.f32.mrb[0].mxu0
        %v1994 = vadd.f32 0.0, %v1993
        %v1995 = vpop.f32.mrb[0].mxu0
        %v1996 = vadd.f32 0.0, %v1995
        %v1997 = vpop.f32.mrb[0].mxu0
        %v1998 = vadd.f32 0.0, %v1997
        %1999 = vmatprep.mubr.bf16.mxu0 0
        %2000 = vmatmul.mubr.bf16.gmra.mrb[0].mxu0 %v1822
        %v2001 = vpop.f32.mrb[0].mxu0
        %v2002 = vadd.f32 0.0, %v2001
        %v2003 = vpop.f32.mrb[0].mxu0
        %v2004 = vadd.f32 0.0, %v2003
        %v2005 = vpop.f32.mrb[0].mxu0
        %v2006 = vadd.f32 0.0, %v2005
        %v2007 = vpop.f32.mrb[0].mxu0
        %v2008 = vadd.f32 0.0, %v2007
        %2009 = vmatprep.mubr.bf16.mxu0 0
        %2010 = vmatmul.mubr.bf16.gmra.mrb[0].mxu0 %v1825
        %v2011 = vpop.f32.mrb[0].mxu0
        %v2012 = vadd.f32 0.0, %v2011
        %v2013 = vpop.f32.mrb[0].mxu0
        %v2014 = vadd.f32 0.0, %v2013
        %v2015 = vpop.f32.mrb[0].mxu0
        %v2016 = vadd.f32 0.0, %v2015
        %v2017 = vpop.f32.mrb[0].mxu0
        %v2018 = vadd.f32 0.0, %v2017
        %2019 = vdwg.mxu0
        %v2020 = vmax.f32 %v1862, %v1864
        %2021 = vmax.xlane.f32.xlu0 %v2020
        %v2022 = vpop.xlane.xlu0 %2021
        %v2023 = vmax.f32 %v1866, %v1868
        %2024 = vmax.xlane.f32.xlu0 %v2023
        %v2025 = vpop.xlane.xlu0 %2024
        %v2026 = vmax.f32 %v1872, %v1874
        %2027 = vmax.xlane.f32.xlu0 %v2026
        %v2028 = vpop.xlane.xlu0 %2027
        %v2029 = vmax.f32 %v1876, %v1878
        %2030 = vmax.xlane.f32.xlu0 %v2029
        %v2031 = vpop.xlane.xlu0 %2030
        %v2032 = vmax.f32 %v1882, %v1884
        %2033 = vmax.xlane.f32.xlu0 %v2032
        %v2034 = vpop.xlane.xlu0 %2033
        %v2035 = vmax.f32 %v1886, %v1888
        %2036 = vmax.xlane.f32.xlu0 %v2035
        %v2037 = vpop.xlane.xlu0 %2036
        %v2038 = vmax.f32 %v1892, %v1894
        %2039 = vmax.xlane.f32.xlu0 %v2038
        %v2040 = vpop.xlane.xlu0 %2039
        %v2041 = vmax.f32 %v1896, %v1898
        %2042 = vmax.xlane.f32.xlu0 %v2041
        %v2043 = vpop.xlane.xlu0 %2042
        %v2044 = vmax.f32 %v1902, %v1904
        %2045 = vmax.xlane.f32.xlu0 %v2044
        %v2046 = vpop.xlane.xlu0 %2045
        %v2047 = vmax.f32 %v1906, %v1908
        %2048 = vmax.xlane.f32.xlu0 %v2047
        %v2049 = vpop.xlane.xlu0 %2048
        %v2050 = vmax.f32 %v1912, %v1914
        %2051 = vmax.xlane.f32.xlu0 %v2050
        %v2052 = vpop.xlane.xlu0 %2051
        %v2053 = vmax.f32 %v1916, %v1918
        %2054 = vmax.xlane.f32.xlu0 %v2053
        %v2055 = vpop.xlane.xlu0 %2054
        %v2056 = vmax.f32 %v1922, %v1924
        %2057 = vmax.xlane.f32.xlu0 %v2056
        %v2058 = vpop.xlane.xlu0 %2057
        %v2059 = vmax.f32 %v1926, %v1928
        %2060 = vmax.xlane.f32.xlu0 %v2059
        %v2061 = vpop.xlane.xlu0 %2060
        %v2062 = vmax.f32 %v1932, %v1934
        %2063 = vmax.xlane.f32.xlu0 %v2062
        %v2064 = vpop.xlane.xlu0 %2063
        %v2065 = vmax.f32 %v1936, %v1938
        %2066 = vmax.xlane.f32.xlu0 %v2065
        %v2067 = vpop.xlane.xlu0 %2066
        %v2068 = vmax.f32 %v1942, %v1944
        %2069 = vmax.xlane.f32.xlu0 %v2068
        %v2070 = vpop.xlane.xlu0 %2069
        %v2071 = vmax.f32 %v1946, %v1948
        %2072 = vmax.xlane.f32.xlu0 %v2071
        %v2073 = vpop.xlane.xlu0 %2072
        %v2074 = vmax.f32 %v1952, %v1954
        %2075 = vmax.xlane.f32.xlu0 %v2074
        %v2076 = vpop.xlane.xlu0 %2075
        %v2077 = vmax.f32 %v1956, %v1958
        %2078 = vmax.xlane.f32.xlu0 %v2077
        %v2079 = vpop.xlane.xlu0 %2078
        %v2080 = vmax.f32 %v1962, %v1964
        %2081 = vmax.xlane.f32.xlu0 %v2080
        %v2082 = vpop.xlane.xlu0 %2081
        %v2083 = vmax.f32 %v1966, %v1968
        %2084 = vmax.xlane.f32.xlu0 %v2083
        %v2085 = vpop.xlane.xlu0 %2084
        %v2086 = vmax.f32 %v1972, %v1974
        %2087 = vmax.xlane.f32.xlu0 %v2086
        %v2088 = vpop.xlane.xlu0 %2087
        %v2089 = vmax.f32 %v1976, %v1978
        %2090 = vmax.xlane.f32.xlu0 %v2089
        %v2091 = vpop.xlane.xlu0 %2090
        %v2092 = vmax.f32 %v1982, %v1984
        %2093 = vmax.xlane.f32.xlu0 %v2092
        %v2094 = vpop.xlane.xlu0 %2093
        %v2095 = vmax.f32 %v1986, %v1988
        %2096 = vmax.xlane.f32.xlu0 %v2095
        %v2097 = vpop.xlane.xlu0 %2096
        %v2098 = vmax.f32 %v1992, %v1994
        %2099 = vmax.xlane.f32.xlu0 %v2098
        %v2100 = vpop.xlane.xlu0 %2099
        %v2101 = vmax.f32 %v1996, %v1998
        %2102 = vmax.xlane.f32.xlu0 %v2101
        %v2103 = vpop.xlane.xlu0 %2102
        %v2104 = vmax.f32 %v2002, %v2004
        %2105 = vmax.xlane.f32.xlu0 %v2104
        %v2106 = vpop.xlane.xlu0 %2105
        %v2107 = vmax.f32 %v2006, %v2008
        %2108 = vmax.xlane.f32.xlu0 %v2107
        %v2109 = vpop.xlane.xlu0 %2108
        %v2110 = vmax.f32 %v2012, %v2014
        %2111 = vmax.xlane.f32.xlu0 %v2110
        %v2112 = vpop.xlane.xlu0 %2111
        %v2113 = vmax.f32 %v2016, %v2018
        %2114 = vmax.xlane.f32.xlu0 %v2113
        %v2115 = vpop.xlane.xlu0 %2114
        %v2116 = vsub.f32 %v1862, %v2022
        %v2117 = vsub.f32 %v1864, %v2022
        %v2118 = vsub.f32 %v1866, %v2025
        %v2119 = vsub.f32 %v1868, %v2025
        %v2120 = vsub.f32 %v1872, %v2028
        %v2121 = vsub.f32 %v1874, %v2028
        %v2122 = vsub.f32 %v1876, %v2031
        %v2123 = vsub.f32 %v1878, %v2031
        %v2124 = vsub.f32 %v1882, %v2034
        %v2125 = vsub.f32 %v1884, %v2034
        %v2126 = vsub.f32 %v1886, %v2037
        %v2127 = vsub.f32 %v1888, %v2037
        %v2128 = vsub.f32 %v1892, %v2040
        %v2129 = vsub.f32 %v1894, %v2040
        %v2130 = vsub.f32 %v1896, %v2043
        %v2131 = vsub.f32 %v1898, %v2043
        %v2132 = vsub.f32 %v1902, %v2046
        %v2133 = vsub.f32 %v1904, %v2046
        %v2134 = vsub.f32 %v1906, %v2049
        %v2135 = vsub.f32 %v1908, %v2049
        %v2136 = vsub.f32 %v1912, %v2052
        %v2137 = vsub.f32 %v1914, %v2052
        %v2138 = vsub.f32 %v1916, %v2055
        %v2139 = vsub.f32 %v1918, %v2055
        %v2140 = vsub.f32 %v1922, %v2058
        %v2141 = vsub.f32 %v1924, %v2058
        %v2142 = vsub.f32 %v1926, %v2061
        %v2143 = vsub.f32 %v1928, %v2061
        %v2144 = vsub.f32 %v1932, %v2064
        %v2145 = vsub.f32 %v1934, %v2064
        %v2146 = vsub.f32 %v1936, %v2067
        %v2147 = vsub.f32 %v1938, %v2067
        %v2148 = vsub.f32 %v1942, %v2070
        %v2149 = vsub.f32 %v1944, %v2070
        %v2150 = vsub.f32 %v1946, %v2073
        %v2151 = vsub.f32 %v1948, %v2073
        %v2152 = vsub.f32 %v1952, %v2076
        %v2153 = vsub.f32 %v1954, %v2076
        %v2154 = vsub.f32 %v1956, %v2079
        %v2155 = vsub.f32 %v1958, %v2079
        %v2156 = vsub.f32 %v1962, %v2082
        %v2157 = vsub.f32 %v1964, %v2082
        %v2158 = vsub.f32 %v1966, %v2085
        %v2159 = vsub.f32 %v1968, %v2085
        %v2160 = vsub.f32 %v1972, %v2088
        %v2161 = vsub.f32 %v1974, %v2088
        %v2162 = vsub.f32 %v1976, %v2091
        %v2163 = vsub.f32 %v1978, %v2091
        %v2164 = vsub.f32 %v1982, %v2094
        %v2165 = vsub.f32 %v1984, %v2094
        %v2166 = vsub.f32 %v1986, %v2097
        %v2167 = vsub.f32 %v1988, %v2097
        %v2168 = vsub.f32 %v1992, %v2100
        %v2169 = vsub.f32 %v1994, %v2100
        %v2170 = vsub.f32 %v1996, %v2103
        %v2171 = vsub.f32 %v1998, %v2103
        %v2172 = vsub.f32 %v2002, %v2106
        %v2173 = vsub.f32 %v2004, %v2106
        %v2174 = vsub.f32 %v2006, %v2109
        %v2175 = vsub.f32 %v2008, %v2109
        %v2176 = vsub.f32 %v2012, %v2112
        %v2177 = vsub.f32 %v2014, %v2112
        %v2178 = vsub.f32 %v2016, %v2115
        %v2179 = vsub.f32 %v2018, %v2115
        %v2180 = vmul.f32 %v2116, 1.442695
        %v2181 = vpow.pop %v2180
        %v2182 = vmul.f32 %v2117, 1.442695
        %v2183 = vpow.pop %v2182
        %v2184 = vmul.f32 %v2118, 1.442695
        %v2185 = vpow.pop %v2184
        %v2186 = vmul.f32 %v2119, 1.442695
        %v2187 = vpow.pop %v2186
        %v2188 = vmul.f32 %v2120, 1.442695
        %v2189 = vpow.pop %v2188
        %v2190 = vmul.f32 %v2121, 1.442695
        %v2191 = vpow.pop %v2190
        %v2192 = vmul.f32 %v2122, 1.442695
        %v2193 = vpow.pop %v2192
        %v2194 = vmul.f32 %v2123, 1.442695
        %v2195 = vpow.pop %v2194
        %v2196 = vmul.f32 %v2124, 1.442695
        %v2197 = vpow.pop %v2196
        %v2198 = vmul.f32 %v2125, 1.442695
        %v2199 = vpow.pop %v2198
        %v2200 = vmul.f32 %v2126, 1.442695
        %v2201 = vpow.pop %v2200
        %v2202 = vmul.f32 %v2127, 1.442695
        %v2203 = vpow.pop %v2202
        %v2204 = vmul.f32 %v2128, 1.442695
        %v2205 = vpow.pop %v2204
        %v2206 = vmul.f32 %v2129, 1.442695
        %v2207 = vpow.pop %v2206
        %v2208 = vmul.f32 %v2130, 1.442695
        %v2209 = vpow.pop %v2208
        %v2210 = vmul.f32 %v2131, 1.442695
        %v2211 = vpow.pop %v2210
        %v2212 = vmul.f32 %v2132, 1.442695
        %v2213 = vpow.pop %v2212
        %v2214 = vmul.f32 %v2133, 1.442695
        %v2215 = vpow.pop %v2214
        %v2216 = vmul.f32 %v2134, 1.442695
        %v2217 = vpow.pop %v2216
        %v2218 = vmul.f32 %v2135, 1.442695
        %v2219 = vpow.pop %v2218
        %v2220 = vmul.f32 %v2136, 1.442695
        %v2221 = vpow.pop %v2220
        %v2222 = vmul.f32 %v2137, 1.442695
        %v2223 = vpow.pop %v2222
        %v2224 = vmul.f32 %v2138, 1.442695
        %v2225 = vpow.pop %v2224
        %v2226 = vmul.f32 %v2139, 1.442695
        %v2227 = vpow.pop %v2226
        %v2228 = vmul.f32 %v2140, 1.442695
        %v2229 = vpow.pop %v2228
        %v2230 = vmul.f32 %v2141, 1.442695
        %v2231 = vpow.pop %v2230
        %v2232 = vmul.f32 %v2142, 1.442695
        %v2233 = vpow.pop %v2232
        %v2234 = vmul.f32 %v2143, 1.442695
        %v2235 = vpow.pop %v2234
        %v2236 = vmul.f32 %v2144, 1.442695
        %v2237 = vpow.pop %v2236
        %v2238 = vmul.f32 %v2145, 1.442695
        %v2239 = vpow.pop %v2238
        %v2240 = vmul.f32 %v2146, 1.442695
        %v2241 = vpow.pop %v2240
        %v2242 = vmul.f32 %v2147, 1.442695
        %v2243 = vpow.pop %v2242
        %v2244 = vmul.f32 %v2148, 1.442695
        %v2245 = vpow.pop %v2244
        %v2246 = vmul.f32 %v2149, 1.442695
        %v2247 = vpow.pop %v2246
        %v2248 = vmul.f32 %v2150, 1.442695
        %v2249 = vpow.pop %v2248
        %v2250 = vmul.f32 %v2151, 1.442695
        %v2251 = vpow.pop %v2250
        %v2252 = vmul.f32 %v2152, 1.442695
        %v2253 = vpow.pop %v2252
        %v2254 = vmul.f32 %v2153, 1.442695
        %v2255 = vpow.pop %v2254
        %v2256 = vmul.f32 %v2154, 1.442695
        %v2257 = vpow.pop %v2256
        %v2258 = vmul.f32 %v2155, 1.442695
        %v2259 = vpow.pop %v2258
        %v2260 = vmul.f32 %v2156, 1.442695
        %v2261 = vpow.pop %v2260
        %v2262 = vmul.f32 %v2157, 1.442695
        %v2263 = vpow.pop %v2262
        %v2264 = vmul.f32 %v2158, 1.442695
        %v2265 = vpow.pop %v2264
        %v2266 = vmul.f32 %v2159, 1.442695
        %v2267 = vpow.pop %v2266
        %v2268 = vmul.f32 %v2160, 1.442695
        %v2269 = vpow.pop %v2268
        %v2270 = vmul.f32 %v2161, 1.442695
        %v2271 = vpow.pop %v2270
        %v2272 = vmul.f32 %v2162, 1.442695
        %v2273 = vpow.pop %v2272
        %v2274 = vmul.f32 %v2163, 1.442695
        %v2275 = vpow.pop %v2274
        %v2276 = vmul.f32 %v2164, 1.442695
        %v2277 = vpow.pop %v2276
        %v2278 = vmul.f32 %v2165, 1.442695
        %v2279 = vpow.pop %v2278
        %v2280 = vmul.f32 %v2166, 1.442695
        %v2281 = vpow.pop %v2280
        %v2282 = vmul.f32 %v2167, 1.442695
        %v2283 = vpow.pop %v2282
        %v2284 = vmul.f32 %v2168, 1.442695
        %v2285 = vpow.pop %v2284
        %v2286 = vmul.f32 %v2169, 1.442695
        %v2287 = vpow.pop %v2286
        %v2288 = vmul.f32 %v2170, 1.442695
        %v2289 = vpow.pop %v2288
        %v2290 = vmul.f32 %v2171, 1.442695
        %v2291 = vpow.pop %v2290
        %v2292 = vmul.f32 %v2172, 1.442695
        %v2293 = vpow.pop %v2292
        %v2294 = vmul.f32 %v2173, 1.442695
        %v2295 = vpow.pop %v2294
        %v2296 = vmul.f32 %v2174, 1.442695
        %v2297 = vpow.pop %v2296
        %v2298 = vmul.f32 %v2175, 1.442695
        %v2299 = vpow.pop %v2298
        %v2300 = vmul.f32 %v2176, 1.442695
        %v2301 = vpow.pop %v2300
        %v2302 = vmul.f32 %v2177, 1.442695
        %v2303 = vpow.pop %v2302
        %v2304 = vmul.f32 %v2178, 1.442695
        %v2305 = vpow.pop %v2304
        %v2306 = vmul.f32 %v2179, 1.442695
        %v2307 = vpow.pop %v2306
        %v2308 = vadd.f32 %v2181, %v2183
        %2309 = vadd.xlane.f32.xlu0 %v2308
        %v2310 = vpop.xlane.xlu0 %2309
        %v2311 = vadd.f32 %v2185, %v2187
        %2312 = vadd.xlane.f32.xlu0 %v2311
        %v2313 = vpop.xlane.xlu0 %2312
        %v2314 = vadd.f32 %v2189, %v2191
        %2315 = vadd.xlane.f32.xlu0 %v2314
        %v2316 = vpop.xlane.xlu0 %2315
        %v2317 = vadd.f32 %v2193, %v2195
        %2318 = vadd.xlane.f32.xlu0 %v2317
        %v2319 = vpop.xlane.xlu0 %2318
        %v2320 = vadd.f32 %v2197, %v2199
        %2321 = vadd.xlane.f32.xlu0 %v2320
        %v2322 = vpop.xlane.xlu0 %2321
        %v2323 = vadd.f32 %v2201, %v2203
        %2324 = vadd.xlane.f32.xlu0 %v2323
        %v2325 = vpop.xlane.xlu0 %2324
        %v2326 = vadd.f32 %v2205, %v2207
        %2327 = vadd.xlane.f32.xlu0 %v2326
        %v2328 = vpop.xlane.xlu0 %2327
        %v2329 = vadd.f32 %v2209, %v2211
        %2330 = vadd.xlane.f32.xlu0 %v2329
        %v2331 = vpop.xlane.xlu0 %2330
        %v2332 = vadd.f32 %v2213, %v2215
        %2333 = vadd.xlane.f32.xlu0 %v2332
        %v2334 = vpop.xlane.xlu0 %2333
        %v2335 = vadd.f32 %v2217, %v2219
        %2336 = vadd.xlane.f32.xlu0 %v2335
        %v2337 = vpop.xlane.xlu0 %2336
        %v2338 = vadd.f32 %v2221, %v2223
        %2339 = vadd.xlane.f32.xlu0 %v2338
        %v2340 = vpop.xlane.xlu0 %2339
        %v2341 = vadd.f32 %v2225, %v2227
        %2342 = vadd.xlane.f32.xlu0 %v2341
        %v2343 = vpop.xlane.xlu0 %2342
        %v2344 = vadd.f32 %v2229, %v2231
        %2345 = vadd.xlane.f32.xlu0 %v2344
        %v2346 = vpop.xlane.xlu0 %2345
        %v2347 = vadd.f32 %v2233, %v2235
        %2348 = vadd.xlane.f32.xlu0 %v2347
        %v2349 = vpop.xlane.xlu0 %2348
        %v2350 = vadd.f32 %v2237, %v2239
        %2351 = vadd.xlane.f32.xlu0 %v2350
        %v2352 = vpop.xlane.xlu0 %2351
        %v2353 = vadd.f32 %v2241, %v2243
        %2354 = vadd.xlane.f32.xlu0 %v2353
        %v2355 = vpop.xlane.xlu0 %2354
        %v2356 = vadd.f32 %v2245, %v2247
        %2357 = vadd.xlane.f32.xlu0 %v2356
        %v2358 = vpop.xlane.xlu0 %2357
        %v2359 = vadd.f32 %v2249, %v2251
        %2360 = vadd.xlane.f32.xlu0 %v2359
        %v2361 = vpop.xlane.xlu0 %2360
        %v2362 = vadd.f32 %v2253, %v2255
        %2363 = vadd.xlane.f32.xlu0 %v2362
        %v2364 = vpop.xlane.xlu0 %2363
        %v2365 = vadd.f32 %v2257, %v2259
        %2366 = vadd.xlane.f32.xlu0 %v2365
        %v2367 = vpop.xlane.xlu0 %2366
        %v2368 = vadd.f32 %v2261, %v2263
        %2369 = vadd.xlane.f32.xlu0 %v2368
        %v2370 = vpop.xlane.xlu0 %2369
        %v2371 = vadd.f32 %v2265, %v2267
        %2372 = vadd.xlane.f32.xlu0 %v2371
        %v2373 = vpop.xlane.xlu0 %2372
        %v2374 = vadd.f32 %v2269, %v2271
        %2375 = vadd.xlane.f32.xlu0 %v2374
        %v2376 = vpop.xlane.xlu0 %2375
        %v2377 = vadd.f32 %v2273, %v2275
        %2378 = vadd.xlane.f32.xlu0 %v2377
        %v2379 = vpop.xlane.xlu0 %2378
        %v2380 = vadd.f32 %v2277, %v2279
        %2381 = vadd.xlane.f32.xlu0 %v2380
        %v2382 = vpop.xlane.xlu0 %2381
        %v2383 = vadd.f32 %v2281, %v2283
        %2384 = vadd.xlane.f32.xlu0 %v2383
        %v2385 = vpop.xlane.xlu0 %2384
        %v2386 = vadd.f32 %v2285, %v2287
        %2387 = vadd.xlane.f32.xlu0 %v2386
        %v2388 = vpop.xlane.xlu0 %2387
        %v2389 = vadd.f32 %v2289, %v2291
        %2390 = vadd.xlane.f32.xlu0 %v2389
        %v2391 = vpop.xlane.xlu0 %2390
        %v2392 = vadd.f32 %v2293, %v2295
        %2393 = vadd.xlane.f32.xlu0 %v2392
        %v2394 = vpop.xlane.xlu0 %2393
        %v2395 = vadd.f32 %v2297, %v2299
        %2396 = vadd.xlane.f32.xlu0 %v2395
        %v2397 = vpop.xlane.xlu0 %2396
        %v2398 = vadd.f32 %v2301, %v2303
        %2399 = vadd.xlane.f32.xlu0 %v2398
        %v2400 = vpop.xlane.xlu0 %2399
        %v2401 = vadd.f32 %v2305, %v2307
        %2402 = vadd.xlane.f32.xlu0 %v2401
        %v2403 = vpop.xlane.xlu0 %2402
        %v2404 = vpack.c.bf16 %v2185, %v2181
        %v2405 = vpack.c.bf16 %v2187, %v2183
        %v2406 = vpack.c.bf16 %v2193, %v2189
        %v2407 = vpack.c.bf16 %v2195, %v2191
        %v2408 = vpack.c.bf16 %v2201, %v2197
        %v2409 = vpack.c.bf16 %v2203, %v2199
        %v2410 = vpack.c.bf16 %v2209, %v2205
        %v2411 = vpack.c.bf16 %v2211, %v2207
        %v2412 = vpack.c.bf16 %v2217, %v2213
        %v2413 = vpack.c.bf16 %v2219, %v2215
        %v2414 = vpack.c.bf16 %v2225, %v2221
        %v2415 = vpack.c.bf16 %v2227, %v2223
        %v2416 = vpack.c.bf16 %v2233, %v2229
        %v2417 = vpack.c.bf16 %v2235, %v2231
        %v2418 = vpack.c.bf16 %v2241, %v2237
        %v2419 = vpack.c.bf16 %v2243, %v2239
        %v2420 = vpack.c.bf16 %v2249, %v2245
        %v2421 = vpack.c.bf16 %v2251, %v2247
        %v2422 = vpack.c.bf16 %v2257, %v2253
        %v2423 = vpack.c.bf16 %v2259, %v2255
        %v2424 = vpack.c.bf16 %v2265, %v2261
        %v2425 = vpack.c.bf16 %v2267, %v2263
        %v2426 = vpack.c.bf16 %v2273, %v2269
        %v2427 = vpack.c.bf16 %v2275, %v2271
        %v2428 = vpack.c.bf16 %v2281, %v2277
        %v2429 = vpack.c.bf16 %v2283, %v2279
        %v2430 = vpack.c.bf16 %v2289, %v2285
        %v2431 = vpack.c.bf16 %v2291, %v2287
        %v2432 = vpack.c.bf16 %v2297, %v2293
        %v2433 = vpack.c.bf16 %v2299, %v2295
        %v2434 = vpack.c.bf16 %v2305, %v2301
        %v2435 = vpack.c.bf16 %v2307, %v2303
        %2436 = vmatprep.subr.bf16.mxu0 %v2405
        %2437 = vmatpush1.bf16.xpose.msra.mxu0 %v2404
        %2438 = vmatprep.subr.bf16.mxu0 %v2407
        %2439 = vmatpush1.bf16.xpose.msra.mxu0 %v2406
        %2440 = vmatprep.subr.bf16.mxu0 %v2409
        %2441 = vmatpush1.bf16.xpose.msra.mxu0 %v2408
        %2442 = vmatprep.subr.bf16.mxu0 %v2411
        %2443 = vmatpush1.bf16.xpose.msra.mxu0 %v2410
        %2444 = vmatprep.subr.bf16.mxu0 %v2413
        %2445 = vmatpush1.bf16.xpose.msra.mxu0 %v2412
        %2446 = vmatprep.subr.bf16.mxu0 %v2415
        %2447 = vmatpush1.bf16.xpose.msra.mxu0 %v2414
        %2448 = vmatprep.subr.bf16.mxu0 %v2417
        %2449 = vmatpush1.bf16.xpose.msra.mxu0 %v2416
        %2450 = vmatprep.subr.bf16.mxu0 %v2419
        %2451 = vmatpush1.bf16.xpose.msra.mxu0 %v2418
        %2452 = vmatprep.subr.bf16.mxu0 %v2421
        %2453 = vmatpush1.bf16.xpose.msra.mxu0 %v2420
        %2454 = vmatprep.subr.bf16.mxu0 %v2423
        %2455 = vmatpush1.bf16.xpose.msra.mxu0 %v2422
        %2456 = vmatprep.subr.bf16.mxu0 %v2425
        %2457 = vmatpush1.bf16.xpose.msra.mxu0 %v2424
        %2458 = vmatprep.subr.bf16.mxu0 %v2427
        %2459 = vmatpush1.bf16.xpose.msra.mxu0 %v2426
        %2460 = vmatprep.subr.bf16.mxu0 %v2429
        %2461 = vmatpush1.bf16.xpose.msra.mxu0 %v2428
        %2462 = vmatprep.subr.bf16.mxu0 %v2431
        %2463 = vmatpush1.bf16.xpose.msra.mxu0 %v2430
        %2464 = vmatprep.subr.bf16.mxu0 %v2433
        %2465 = vmatpush1.bf16.xpose.msra.mxu0 %v2432
        %2466 = vmatprep.subr.bf16.mxu0 %v2435
        %2467 = vmatpush1.bf16.xpose.msra.mxu0 %v2434
        %2468 = vmatprep.mubr.bf16.mxu0 %v897
        %2469 = vmatmul.mubr.bf16.gmra.mrb[0].mxu0 %v896
        %v2470 = vpop.f32.mrb[0].mxu0
        %v2471 = vadd.f32 0.0, %v2470
        %v2472 = vpop.f32.mrb[0].mxu0
        %v2473 = vadd.f32 0.0, %v2472
        %v2474 = vpop.f32.mrb[0].mxu0
        %v2475 = vadd.f32 0.0, %v2474
        %v2476 = vpop.f32.mrb[0].mxu0
        %v2477 = vadd.f32 0.0, %v2476
        %2478 = vdwg.mxu0
        %v2479 = vrcp.pop %v2310
        %v2480 = vrcp.pop %v2313
        %v2481 = vrcp.pop %v2316
        %v2482 = vrcp.pop %v2319
        %v2483 = vrcp.pop %v2322
        %v2484 = vrcp.pop %v2325
        %v2485 = vrcp.pop %v2328
        %v2486 = vrcp.pop %v2331
        %v2487 = vrcp.pop %v2334
        %v2488 = vrcp.pop %v2337
        %v2489 = vrcp.pop %v2340
        %v2490 = vrcp.pop %v2343
        %v2491 = vrcp.pop %v2346
        %v2492 = vrcp.pop %v2349
        %v2493 = vrcp.pop %v2352
        %v2494 = vrcp.pop %v2355
        %v2495 = vrcp.pop %v2358
        %v2496 = vrcp.pop %v2361
        %v2497 = vrcp.pop %v2364
        %v2498 = vrcp.pop %v2367
        %v2499 = vrcp.pop %v2370
        %v2500 = vrcp.pop %v2373
        %v2501 = vrcp.pop %v2376
        %v2502 = vrcp.pop %v2379
        %v2503 = vrcp.pop %v2382
        %v2504 = vrcp.pop %v2385
        %v2505 = vrcp.pop %v2388
        %v2506 = vrcp.pop %v2391
        %v2507 = vrcp.pop %v2394
        %v2508 = vrcp.pop %v2397
        %v2509 = vrcp.pop %v2400
        %v2510 = vrcp.pop %v2403
        %2511 = vxpose.xlu0.b32.start [1/16] %v2479, 128
        %2512 = vxpose.xlu0.b32.cont [2/16] %v2480, 128
        %2513 = vxpose.xlu0.b32.cont [3/16] %v2481, 128
        %2514 = vxpose.xlu0.b32.cont [4/16] %v2482, 128
        %2515 = vxpose.xlu0.b32.cont [5/16] %v2483, 128
        %2516 = vxpose.xlu0.b32.cont [6/16] %v2484, 128
        %2517 = vxpose.xlu0.b32.cont [7/16] %v2485, 128
        %2518 = vxpose.xlu0.b32.cont [8/16] %v2486, 128
        %2519 = vxpose.xlu0.b32.cont [9/16] %v2487, 128
        %2520 = vxpose.xlu0.b32.cont [10/16] %v2488, 128
        %2521 = vxpose.xlu0.b32.cont [11/16] %v2489, 128
        %2522 = vxpose.xlu0.b32.cont [12/16] %v2490, 128
        %2523 = vxpose.xlu0.b32.cont [13/16] %v2491, 128
        %2524 = vxpose.xlu0.b32.cont [14/16] %v2492, 128
        %2525 = vxpose.xlu0.b32.cont [15/16] %v2493, 128
        %2526 = vxpose.xlu0.b32.end [16/16] %v2494, 128
        %v2527 = vpop.trf.xlu0
        %v2528 = vpop.trf.xlu0
        %v2529 = vpop.trf.xlu0
        %v2530 = vpop.trf.xlu0
        %v2531 = vpop.trf.xlu0
        %v2532 = vpop.trf.xlu0
        %v2533 = vpop.trf.xlu0
        %v2534 = vpop.trf.xlu0
        %v2535 = vpop.trf.xlu0
        %v2536 = vpop.trf.xlu0
        %v2537 = vpop.trf.xlu0
        %v2538 = vpop.trf.xlu0
        %v2539 = vpop.trf.xlu0
        %v2540 = vpop.trf.xlu0
        %v2541 = vpop.trf.xlu0
        %v2542 = vpop.trf.xlu0
        %2543 = vxpose.xlu0.b32.start [1/16] %v2495, 128
        %2544 = vxpose.xlu0.b32.cont [2/16] %v2496, 128
        %2545 = vxpose.xlu0.b32.cont [3/16] %v2497, 128
        %2546 = vxpose.xlu0.b32.cont [4/16] %v2498, 128
        %2547 = vxpose.xlu0.b32.cont [5/16] %v2499, 128
        %2548 = vxpose.xlu0.b32.cont [6/16] %v2500, 128
        %2549 = vxpose.xlu0.b32.cont [7/16] %v2501, 128
        %2550 = vxpose.xlu0.b32.cont [8/16] %v2502, 128
        %2551 = vxpose.xlu0.b32.cont [9/16] %v2503, 128
        %2552 = vxpose.xlu0.b32.cont [10/16] %v2504, 128
        %2553 = vxpose.xlu0.b32.cont [11/16] %v2505, 128
        %2554 = vxpose.xlu0.b32.cont [12/16] %v2506, 128
        %2555 = vxpose.xlu0.b32.cont [13/16] %v2507, 128
        %2556 = vxpose.xlu0.b32.cont [14/16] %v2508, 128
        %2557 = vxpose.xlu0.b32.cont [15/16] %v2509, 128
        %2558 = vxpose.xlu0.b32.end [16/16] %v2510, 128
        %v2559 = vpop.trf.xlu0
        %v2560 = vpop.trf.xlu0
        %v2561 = vpop.trf.xlu0
        %v2562 = vpop.trf.xlu0
        %v2563 = vpop.trf.xlu0
        %v2564 = vpop.trf.xlu0
        %v2565 = vpop.trf.xlu0
        %v2566 = vpop.trf.xlu0
        %v2567 = vpop.trf.xlu0
        %v2568 = vpop.trf.xlu0
        %v2569 = vpop.trf.xlu0
        %v2570 = vpop.trf.xlu0
        %v2571 = vpop.trf.xlu0
        %v2572 = vpop.trf.xlu0
        %v2573 = vpop.trf.xlu0
        %v2574 = vpop.trf.xlu0
        %v2575 = vlaneseq
        %v2576 = vshrl.u32 %v2575, 7
        %v2577 = vsub.s32 0, %v2576
        %v2578 = vrot.slane %v2527, %v2577
        %v2579 = vlaneseq
        %v2580 = vshrl.u32 %v2579, 7
        %v2581 = vsub.s32 0, %v2580
        %v2582 = vrot.slane %v2559, %v2581
        %v2583 = vmul.f32 %v2471, %v2578
        %v2584 = vmul.f32 %v2473, %v2582
        %v2585 = vmul.f32 %v2475, %v2578
        %v2586 = vmul.f32 %v2477, %v2582
        %v2587 = vpack.c.bf16 %v2585, %v2583
        %v2588 = vpack.c.bf16 %v2586, %v2584
        %2589 = vst [vmem:[#allocation3 + $0x10] sm:$0xff] %v2587
        %2590 = vst [vmem:[#allocation3 + $0x18] sm:$0xff] %v2588
        %v2591 = vld [vmem:[%s7] sm:$0xf]
        %v2592 = vld [vmem:[%s7 + $0x4] sm:$0xf]
        %v2593 = vld [vmem:[%s7 + $0x8] sm:$0xf]
        %v2594 = vld [vmem:[%s7 + $0xc] sm:$0xf]
        %v2595 = vld [vmem:[#allocation3] sm:$0xff]
        %v2596 = vld [vmem:[#allocation3 + $0x8] sm:$0xff]
        %v2597 = vld [vmem:[#allocation3 + $0x10] sm:$0xff]
        %v2598 = vld [vmem:[#allocation3 + $0x18] sm:$0xff]
        %v2599 = vld [vmem:[%s8] sm:$0xff]
        %v2600 = vld [vmem:[%s8 + $0x8] sm:$0xff]
        %v2601 = vld [vmem:[%s8 + $0x10] sm:$0xff]
        %v2602 = vld [vmem:[%s8 + $0x18] sm:$0xff]
        %2604 = vset.pattern.permute.xlu0 0
        %2605 = vperm.xlu0 %2604, %v2599
        %v2606 = vpop.permute.xlu0 %2605
        %2609 = vset.pattern.permute.xlu0 0
        %2610 = vperm.xlu0 %2609, %v2600
        %v2611 = vpop.permute.xlu0 %2610
        %2614 = vset.pattern.permute.xlu0 0
        %2615 = vperm.xlu0 %2614, %v2601
        %v2616 = vpop.permute.xlu0 %2615
        %2619 = vset.pattern.permute.xlu0 0
        %2620 = vperm.xlu0 %2619, %v2602
        %v2621 = vpop.permute.xlu0 %2620
        %v2627 = vunpack.c.l.b16 %v2591
        %v2628 = vunpack.c.l.b16 %v2592
        %v2629 = vunpack.c.l.b16 %v2593
        %v2630 = vunpack.c.l.b16 %v2594
        %v2631 = vpack.c.b16 %v2628, %v2627
        %v2632 = vpack.c.b16 %v2630, %v2629
        %v2634 = vsel %vm405, %v2631, 0
        %v2637 = vsel %vm405, %v2632, 0
        %2639 = vmatprep.subr.bf16.mxu0 %v2596
        %2640 = vmatpush1.bf16.msra.mxu0 %v2595
        %2641 = vmatprep.subr.bf16.mxu0 %v2598
        %2642 = vmatpush1.bf16.msra.mxu0 %v2597
        %2643 = vmatprep.subr.bf16.mxu0 0
        %2644 = vmatpush1.bf16.msra.mxu0 0
        %2645 = vmatprep.subr.bf16.mxu0 0
        %2646 = vmatpush1.bf16.msra.mxu0 0
        %2647 = vmatprep.subr.bf16.mxu0 0
        %2648 = vmatpush1.bf16.msra.mxu0 0
        %2649 = vmatprep.subr.bf16.mxu0 0
        %2650 = vmatpush1.bf16.msra.mxu0 0
        %2651 = vmatprep.subr.bf16.mxu0 0
        %2652 = vmatpush1.bf16.msra.mxu0 0
        %2653 = vmatprep.subr.bf16.mxu0 0
        %2654 = vmatpush1.bf16.msra.mxu0 0
        %2655 = vmatprep.subr.bf16.mxu0 0
        %2656 = vmatpush1.bf16.msra.mxu0 0
        %2657 = vmatprep.subr.bf16.mxu0 0
        %2658 = vmatpush1.bf16.msra.mxu0 0
        %2659 = vmatprep.subr.bf16.mxu0 0
        %2660 = vmatpush1.bf16.msra.mxu0 0
        %2661 = vmatprep.subr.bf16.mxu0 0
        %2662 = vmatpush1.bf16.msra.mxu0 0
        %2663 = vmatprep.subr.bf16.mxu0 0
        %2664 = vmatpush1.bf16.msra.mxu0 0
        %2665 = vmatprep.subr.bf16.mxu0 0
        %2666 = vmatpush1.bf16.msra.mxu0 0
        %2667 = vmatprep.subr.bf16.mxu0 0
        %2668 = vmatpush1.bf16.msra.mxu0 0
        %2669 = vmatprep.subr.bf16.mxu0 0
        %2670 = vmatpush1.bf16.msra.mxu0 0
        %2671 = vmatprep.mubr.bf16.mxu0 0
        %2672 = vmatmul.mubr.bf16.gmra.mrb[0].mxu0 %v2634
        %v2673 = vpop.f32.mrb[0].mxu0
        %v2674 = vadd.f32 %v2606, %v2673
        %v2675 = vpop.f32.mrb[0].mxu0
        %v2676 = vadd.f32 %v2606, %v2675
        %v2677 = vpop.f32.mrb[0].mxu0
        %v2678 = vadd.f32 %v2611, %v2677
        %v2679 = vpop.f32.mrb[0].mxu0
        %v2680 = vadd.f32 %v2611, %v2679
        %2681 = vmatprep.mubr.bf16.mxu0 0
        %2682 = vmatmul.mubr.bf16.gmra.mrb[0].mxu0 %v2637
        %v2683 = vpop.f32.mrb[0].mxu0
        %v2684 = vadd.f32 %v2616, %v2683
        %v2685 = vpop.f32.mrb[0].mxu0
        %v2686 = vadd.f32 %v2616, %v2685
        %v2687 = vpop.f32.mrb[0].mxu0
        %v2688 = vadd.f32 %v2621, %v2687
        %v2689 = vpop.f32.mrb[0].mxu0
        %v2690 = vadd.f32 %v2621, %v2689
        %2691 = vdwg.mxu0
        %v2692 = vadd.f32 %v2674, %v352
        %v2693 = vadd.f32 %v2676, %v353
        %v2694 = vadd.f32 %v2678, %v354
        %v2695 = vadd.f32 %v2680, %v355
        %v2696 = vadd.f32 %v2684, %v356
        %v2697 = vadd.f32 %v2686, %v357
        %v2698 = vadd.f32 %v2688, %v358
        %v2699 = vadd.f32 %v2690, %v359
        %2700 = vst [vmem:[%s350] sm:$0xff] %v2692
        %2701 = vst [vmem:[%s350 + $0x8] sm:$0xff] %v2693
        %2702 = vst [vmem:[%s350 + $0x10] sm:$0xff] %v2694
        %2703 = vst [vmem:[%s350 + $0x18] sm:$0xff] %v2695
        %2704 = vst [vmem:[%s350 + $0x20] sm:$0xff] %v2696
        %2705 = vst [vmem:[%s350 + $0x28] sm:$0xff] %v2697
        %2706 = vst [vmem:[%s350 + $0x30] sm:$0xff] %v2698
        %2707 = vst [vmem:[%s350 + $0x38] sm:$0xff] %v2699
        %s2708 = sand.u32 %s228, 1
        %s2709 = scalar_lea.sflag [#allocation6], %s2708
        %s2710 = sand.u32 %s228, 1
        %s2711 = smul.addr %s2710, 64
        %s2712 = scalar_lea.vmem [#allocation7], %s2711
        // Predicated region
        $region61: #{tpu_custom_call.1} parent=55 // pred_check
          %p2713 = pneg %p238
        $region62: #{tpu_custom_call.1} parent=55 // pred_check_branch
          %2715 = sbr.rel (%p2713) target = $region64
        $region63: #{tpu_custom_call.1} parent=55 // pred_region
          %s2717 = ssub.s32 1024, 1024
          %2718 = vsyncadd %s2709, %s2717
          %s2719 = smul.addr %s26, 8
          %s2720 = smul.addr %s2719, 128
          %s2721 = scalar_lea.hbm %s9, %s2720
          %s2722 = sshll.u32 %s2712, 4
          %s2723 = int_to_ptr.vmem [resolvable:$true] %s2722
          %2728 = dma.vmem_to_hbm [thread:$0]  %s2723, 1024, %s2721, %s2709, 256, 256, 16
        $region64: #{tpu_custom_call.1} parent=55 // pred_fallthru
          _
      $region56: #{tpu_custom_call.1} parent=5 // pred_fallthru
        _
      %p2729 = scmp.le.s32.totalorder 2, %s21
      // Predicated region
      $region65: #{tpu_custom_call.1} parent=5 // pred_check
        %p2730 = pneg %p2729
      $region66: #{tpu_custom_call.1} parent=5 // pred_check_branch
        %2732 = sbr.rel (%p2730) target = $region68
      $region67: #{tpu_custom_call.1} parent=5 // pred_region
        %s2733 = ssub.s32 %s21, 2
        // Predicated region
        $region69: #{tpu_custom_call.1} parent=67 // pred_check
          %p2734 = pneg %p244
        $region70: #{tpu_custom_call.1} parent=67 // pred_check_branch
          %2736 = sbr.rel (%p2734) target = $region72
        $region71: #{tpu_custom_call.1} parent=67 // pred_region
          %s2737 = sand.u32 %s229, 1
          %s2738 = scalar_lea.sflag [#allocation6], %s2737
          %s2739 = sand.u32 %s229, 1
          %s2740 = smul.addr %s2739, 64
          %s2741 = scalar_lea.vmem [#allocation7], %s2740
          %2742 = dma.done %s2738, 1024
        $region72: #{tpu_custom_call.1} parent=67 // pred_fallthru
          _
      $region68: #{tpu_custom_call.1} parent=5 // pred_fallthru
        _
    $region6: #{tpu_custom_call.1} parent=1 // loop_footer
      %s25 = sadd.s32 1, %s21
    $region7: #{tpu_custom_call.1} parent=1 // loop_footer_branch
      %20 = sbr.rel target = $region3
    $region8: #{tpu_custom_call.1} parent=1 // loop_exit
      _
    %2743 = vsyncpa [#allocation5], 1
    %s2744 = scalar_lea.sflag [#allocation5], 1
    %2745 = vsyncpa %s2744, 1
    %2746 = vsyncpa [#allocation6], 1
    %s2747 = scalar_lea.sflag [#allocation6], 1
    %2748 = vsyncpa %s2747, 1

</llo_original>
